<compile_context>
chip_gen: v7x
topology: tpu7x:2x2x1
jax: 0.10.0
libtpu: 0.0.40
codegen_flags: <defaults>
</compile_context>

<pallas_src>
import functools

import jax
import jax.numpy as jnp
from jax.experimental import pallas as pl
from jax.experimental.pallas import tpu as pltpu


# ---------------------------------------------------------------------------
# Fused STConvBlock kernel: one grid step = `bb` batch elements; every
# intermediate stays in VMEM / vregs (no HBM round-trips between stages).
# ---------------------------------------------------------------------------
def stconv_kernel(x_ref, w1_ref, b1_ref, wg_ref, bg_ref, w2_ref, b2_ref, p_ref,
                  o_ref):
    # x_ref : [bb, T,  N*c_t]        input, channels-last, zero-padded to c_t
    # w1_ref: [Kt*N*c_t, 2*N*c_t]    tap-stacked block-diag tconv1 weights (A|B)
    # wg_ref: [N*c_t, N*c_t]         combined graph operator (kernel x theta)
    # w2_ref: [Kt*N*c_t, 2*N*c_oo]   tap-stacked block-diag tconv2 weights (A|B)
    # p_ref : [N*c_oo, N*c_oo]       per-channel node-average matrix (layer norm)
    # o_ref : [bb, T2, N*c_oo]
    f32 = jnp.float32
    mm_dt = w1_ref.dtype                        # matmul operand dtype (bf16/f32)

    bb, T, NCt = x_ref.shape
    NCoo = p_ref.shape[0]
    Kt1 = w1_ref.shape[0] // NCt
    Kt2 = w2_ref.shape[0] // NCt
    T1 = T - Kt1 + 1
    T2 = T1 - Kt2 + 1

    # Per-batch-element 2-D slabs (keeps every op a plain 2-D slice / concat).
    xb = [x_ref[j] for j in range(bb)]          # bb x [T, NCt], f32

    # ---- temporal conv 1 + GLU: Kt taps merged along the contraction dim ----
    xs1 = jnp.concatenate(
        [jnp.concatenate([xj[kt:kt + T1, :] for kt in range(Kt1)], axis=1)
         for xj in xb], axis=0)                 # [bb*T1, Kt1*NCt]
    acc1 = jnp.dot(xs1.astype(mm_dt), w1_ref[...],
                   preferred_element_type=f32) + b1_ref[...]
    # channel-zero-pad residual = the padded input itself, kept in f32
    res1 = jnp.concatenate([xj[Kt1 - 1:, :] for xj in xb], axis=0)
    x1 = (acc1[:, :NCt] + res1) * jax.nn.sigmoid(acc1[:, NCt:])   # [bb*T1, NCt]

    # ---- spatial graph conv (all bb*T1 time steps in ONE matmul) + res + ReLU --
    g = jnp.dot(x1.astype(mm_dt), wg_ref[...],
                preferred_element_type=f32) + bg_ref[...]
    x2 = jnp.maximum(g + x1, 0.0)                                 # [bb*T1, NCt]

    # ---- temporal conv 2 + GLU (identity residual, kept in f32) ----
    xs2 = jnp.concatenate(
        [jnp.concatenate([x2[j * T1 + kt: j * T1 + kt + T2, :]
                          for kt in range(Kt2)], axis=1)
         for j in range(bb)], axis=0)           # [bb*T2, Kt2*NCt]
    acc2 = jnp.dot(xs2.astype(mm_dt), w2_ref[...],
                   preferred_element_type=f32) + b2_ref[...]
    res2 = jnp.concatenate([x2[j * T1 + Kt2 - 1: j * T1 + Kt2 - 1 + T2, :]
                            for j in range(bb)], axis=0)
    x3 = (acc2[:, :NCoo] + res2) * jax.nn.sigmoid(acc2[:, NCoo:])  # [bb*T2, NCoo]

    # ---- layer norm over (T2, N) per channel: fused sum / sum-of-squares ----
    x3sq = x3 * x3
    stats = jnp.concatenate(
        [jnp.sum(x3[j * T2:(j + 1) * T2, :], axis=0, keepdims=True)
         for j in range(bb)] +
        [jnp.sum(x3sq[j * T2:(j + 1) * T2, :], axis=0, keepdims=True)
         for j in range(bb)], axis=0)           # [2*bb, NCoo]
    red = jnp.dot(stats, p_ref[...], preferred_element_type=f32) * (1.0 / T2)
    mean = red[:bb, :]                          # per-channel mean, node-broadcast
    var = jnp.maximum(red[bb:, :] - mean * mean, 0.0)
    inv = 1.0 / (jnp.sqrt(var) + 1e-6)          # exact: matches (x-mean)/(std+eps)
    for j in range(bb):
        o_ref[j] = ((x3[j * T2:(j + 1) * T2, :] - mean[j:j + 1, :])
                    * inv[j:j + 1, :]).astype(o_ref.dtype)


# ---------------------------------------------------------------------------
# One-time parameter folding (hoisted OUT of the per-call forward path).
# ---------------------------------------------------------------------------
def precompute_stconv_params(params, n_nodes, matmul_dtype=jnp.bfloat16):
    (w1a, w1b, b1a, b1b, theta, gbias, kernel_mat, w2a, w2b, b2a, b2b) = params
    f32 = jnp.float32
    N = n_nodes
    Kt, c_si, c_t = w1a.shape
    c_oo = w2a.shape[2]
    Ks = kernel_mat.shape[1] // kernel_mat.shape[0]

    # TODO(synk): the c_in > c_out TemporalConvLayer residual uses an UNTRAINED
    # 1x1 conv created inside forward(); not implemented (requires c_si <= c_t).
    assert c_si <= c_t, "c_si > c_t (untrained 1x1-conv residual) unsupported"
    # TODO(synk): tconv2 channel-pad residual (c_t < c_oo) not implemented.
    assert c_t == c_oo, "c_t != c_oo unsupported"

    eyeN = jnp.eye(N, dtype=f32)

    def blockdiag(w):  # [Kt, ci, co] -> [Kt, N*ci, N*co], per-node block diagonal
        k_, ci, co = w.shape
        return jnp.einsum('nm,kcd->kncmd', eyeN,
                          w.astype(f32)).reshape(k_, N * ci, N * co)

    # tconv1: zero-pad the input-channel rows c_si -> c_t (matches the padded
    # input layout), then stack the Kt taps along the contraction dim.
    pad_c = ((0, 0), (0, c_t - c_si), (0, 0))
    W1 = jnp.concatenate([blockdiag(jnp.pad(w1a.astype(f32), pad_c)),
                          blockdiag(jnp.pad(w1b.astype(f32), pad_c))], axis=2)
    W1 = W1.reshape(Kt * N * c_t, 2 * N * c_t).astype(matmul_dtype)
    b1 = jnp.concatenate([jnp.tile(b1a.astype(f32), N),
                          jnp.tile(b1b.astype(f32), N)]).reshape(1, 2 * N * c_t)

    W2 = jnp.concatenate([blockdiag(w2a), blockdiag(w2b)], axis=2)
    W2 = W2.reshape(Kt * N * c_t, 2 * N * c_oo).astype(matmul_dtype)
    b2 = jnp.concatenate([jnp.tile(b2a.astype(f32), N),
                          jnp.tile(b2b.astype(f32), N)]).reshape(1, 2 * N * c_oo)

    # combined graph operator:
    #   Wg[m*C+c, n*C+d] = sum_k kernel[m, k*N+n] * theta[c*Ks+k, d]
    km = kernel_mat.astype(f32).reshape(N, Ks, N)
    th = theta.astype(f32).reshape(c_t, Ks, c_t)
    Wg = jnp.einsum('mkn,ckd->mcnd', km, th).reshape(N * c_t, N * c_t)
    Wg = Wg.astype(matmul_dtype)
    bg = jnp.tile(gbias.astype(f32), N).reshape(1, N * c_t)

    # per-channel node-average + broadcast matrix (layer-norm stats, kept f32)
    P = jnp.tile(jnp.eye(c_oo, dtype=f32), (N, N)) / N

    return (W1, b1, Wg, bg, W2, b2, P)


# ---------------------------------------------------------------------------
# Forward wrapper: NCHW [B, C, T, N] in / out, one pallas_call.
# ---------------------------------------------------------------------------
@functools.partial(jax.jit, static_argnames=("batch_block",))
def stconv_forward(x_nchw, folded, batch_block=None):
    """batch_block: batch elements per grid step.  None -> whole batch in ONE
    step (best on single-TC v5e/v6e).  On v7x keep B/batch_block an even
    number >= 2 so the "parallel" grid axis is split across both TensorCores."""
    W1, b1, Wg, bg, W2, b2, P = folded
    B, c_si, T, N = x_nchw.shape
    NCt = Wg.shape[0]
    NCoo = P.shape[0]
    c_t = NCt // N
    c_oo = NCoo // N
    Kt1 = W1.shape[0] // NCt
    Kt2 = W2.shape[0] // NCt
    T1 = T - Kt1 + 1
    T2 = T1 - Kt2 + 1

    bb = B if batch_block is None else batch_block
    assert B % bb == 0, (B, bb)

    f32 = jnp.float32
    # channels-last, zero-pad c_si -> c_t, flatten nodes*channels onto lanes
    x = jnp.transpose(x_nchw.astype(f32), (0, 2, 3, 1))         # [B, T, N, c_si]
    x = jnp.pad(x, ((0, 0), (0, 0), (0, 0), (0, c_t - c_si)))   # [B, T, N, c_t]
    x_flat = x.reshape(B, T, NCt)

    out_flat = pl.pallas_call(
        stconv_kernel,
        out_shape=jax.ShapeDtypeStruct((B, T2, NCoo), f32),
        grid=(B // bb,),
        in_specs=[
            pl.BlockSpec((bb, T, NCt), lambda i: (i, 0, 0)),
            # grid-invariant operands (constant index_map -> fetched once per
            # call; for large N*C on v7x consider pipeline_mode=pl.Buffered(1))
            pl.BlockSpec((Kt1 * NCt, 2 * NCt), lambda i: (0, 0)),
            pl.BlockSpec((1, 2 * NCt), lambda i: (0, 0)),
            pl.BlockSpec((NCt, NCt), lambda i: (0, 0)),
            pl.BlockSpec((1, NCt), lambda i: (0, 0)),
            pl.BlockSpec((Kt2 * NCt, 2 * NCoo), lambda i: (0, 0)),
            pl.BlockSpec((1, 2 * NCoo), lambda i: (0, 0)),
            pl.BlockSpec((NCoo, NCoo), lambda i: (0, 0)),
        ],
        out_specs=pl.BlockSpec((bb, T2, NCoo), lambda i: (i, 0, 0)),
        compiler_params=pltpu.CompilerParams(
            dimension_semantics=("parallel",)),
    )(x_flat, W1, b1, Wg, bg, W2, b2, P)

    # back to NCHW: [B, c_oo, T2, N]
    return jnp.transpose(out_flat.reshape(B, T2, N, c_oo), (0, 3, 1, 2))


# ---------------------------------------------------------------------------
# Pure-JAX reference mirroring the PyTorch module (for verification).
# ---------------------------------------------------------------------------
def ref_tconv_glu(x, wa, wb, ba, bb_, Kt):
    B, c_in, T, N = x.shape
    c_out = wa.shape[2]
    if c_in < c_out:
        x_input = jnp.concatenate(
            [x, jnp.zeros((B, c_out - c_in, T, N), x.dtype)], axis=1)
    else:
        x_input = x
    T_out = T - Kt + 1
    A = jnp.zeros((B, c_out, T_out, N), jnp.float32)
    G = jnp.zeros((B, c_out, T_out, N), jnp.float32)
    for kt in range(Kt):
        xs = x[:, :, kt:kt + T_out, :]
        A = A + jnp.einsum('bctn,cd->bdtn', xs, wa[kt])
        G = G + jnp.einsum('bctn,cd->bdtn', xs, wb[kt])
    A = A + ba[None, :, None, None]
    G = G + bb_[None, :, None, None]
    x_input = x_input[:, :, Kt - 1:, :]
    return (A + x_input) * jax.nn.sigmoid(G)


def ref_gconv(x_t, kernel_mat, theta, gbias, Ks, c_in, c_out):
    B, n, _ = x_t.shape
    x_tmp = jnp.transpose(x_t, (0, 2, 1)).reshape(B * c_in, n)
    x_mul = x_tmp @ kernel_mat
    x_mul = x_mul.reshape(B, c_in, Ks, n)
    x_ker = jnp.transpose(x_mul, (0, 3, 1, 2)).reshape(B * n, c_in * Ks)
    x_g = x_ker @ theta + gbias
    return x_g.reshape(B, n, c_out)


def ref_sconv(x, kernel_mat, theta, gbias, Ks):
    B, C, T, N = x.shape
    outs = []
    for t in range(T):
        x_t = jnp.transpose(x[:, :, t, :], (0, 2, 1))
        o = ref_gconv(x_t, kernel_mat, theta, gbias, Ks, C, C)
        outs.append(jnp.transpose(o, (0, 2, 1)))
    x_gc = jnp.stack(outs, axis=2)
    return jax.nn.relu(x_gc + x)


def ref_layer_norm(x, eps=1e-6):
    mean = x.mean(axis=(2, 3), keepdims=True)
    var = jnp.mean((x - mean) ** 2, axis=(2, 3), keepdims=True)
    return (x - mean) / (jnp.sqrt(var) + eps)


def reference(x, params, Ks, Kt):
    (w1a, w1b, b1a, b1b, theta, gbias, kernel_mat, w2a, w2b, b2a, b2b) = params
    x_s = ref_tconv_glu(x, w1a, w1b, b1a, b1b, Kt)
    x_t = ref_sconv(x_s, kernel_mat, theta, gbias, Ks)
    x_o = ref_tconv_glu(x_t, w2a, w2b, b2a, b2b, Kt)
    return ref_layer_norm(x_o)


# ---------------------------------------------------------------------------
if __name__ == "__main__":
    key = jax.random.PRNGKey(0)
    ks = jax.random.split(key, 12)

    B, T, N = 2, 12, 16
    c_si, c_t, c_oo = 4, 8, 8        # c_t == c_oo avoids the untrained 1x1-conv
                                     # fallback path in TemporalConvLayer
    Ks, Kt = 3, 3

    x = jax.random.normal(ks[0], (B, c_si, T, N), jnp.float32)
    kernel_mat = jax.random.normal(ks[1], (N, Ks * N), jnp.float32) / N

    # tconv1 (c_si -> c_t): GLU halves A / B and their biases
    w1a = jax.random.normal(ks[2], (Kt, c_si, c_t), jnp.float32) * 0.3
    w1b = jax.random.normal(ks[3], (Kt, c_si, c_t), jnp.float32) * 0.3
    b1a = jax.random.normal(ks[4], (c_t,), jnp.float32) * 0.1
    b1b = jax.random.normal(ks[5], (c_t,), jnp.float32) * 0.1

    # graph conv theta (xavier-uniform-like, shape (Ks*c_in, c_out)), zero bias
    limit = (6.0 / (Ks * c_t + c_t)) ** 0.5
    theta = jax.random.uniform(ks[6], (Ks * c_t, c_t), jnp.float32, -limit, limit)
    gbias = jnp.zeros((c_t,), jnp.float32)

    # tconv2 (c_t -> c_oo)
    w2a = jax.random.normal(ks[7], (Kt, c_t, c_oo), jnp.float32) * 0.3
    w2b = jax.random.normal(ks[8], (Kt, c_t, c_oo), jnp.float32) * 0.3
    b2a = jax.random.normal(ks[9], (c_oo,), jnp.float32) * 0.1
    b2b = jax.random.normal(ks[10], (c_oo,), jnp.float32) * 0.1

    params = (w1a, w1b, b1a, b1b, theta, gbias, kernel_mat, w2a, w2b, b2a, b2b)

    expected_shape = (B, c_oo, T - 2 * (Kt - 1), N)
    ref = reference(x, params, Ks, Kt)

    # --- f32 matmul path, one batch element per grid step (grid=(2,)) ---------
    folded_f32 = precompute_stconv_params(params, N, matmul_dtype=jnp.float32)
    out_f32 = jax.block_until_ready(stconv_forward(x, folded_f32, batch_block=1))
    assert out_f32.shape == expected_shape, (out_f32.shape, expected_shape)
    err_f32 = float(jnp.max(jnp.abs(out_f32 - ref)))
    assert jnp.allclose(out_f32, ref, atol=3e-2, rtol=3e-2), err_f32

    # --- bf16 matmul path (MXU-native), whole batch stacked into one step -----
    folded_bf16 = precompute_stconv_params(params, N, matmul_dtype=jnp.bfloat16)
    out_bf16 = jax.block_until_ready(stconv_forward(x, folded_bf16,
                                                    batch_block=None))
    assert out_bf16.shape == expected_shape, (out_bf16.shape, expected_shape)
    err_bf16 = float(jnp.max(jnp.abs(out_bf16 - ref)))
    assert jnp.allclose(out_bf16, ref, atol=5e-2, rtol=5e-2), err_bf16

    print("KERNEL_OK")
</pallas_src>

<mosaic_0001>
module attributes {stable_mosaic.version = 11 : i64} {
  func.func @stconv_kernel(%arg0: i32, %arg1: memref<1x12x128xf32, #tpu.memory_space<vmem>>, %arg2: memref<384x256xf32, #tpu.memory_space<vmem>>, %arg3: memref<1x256xf32, #tpu.memory_space<vmem>>, %arg4: memref<128x128xf32, #tpu.memory_space<vmem>>, %arg5: memref<1x128xf32, #tpu.memory_space<vmem>>, %arg6: memref<384x256xf32, #tpu.memory_space<vmem>>, %arg7: memref<1x256xf32, #tpu.memory_space<vmem>>, %arg8: memref<128x128xf32, #tpu.memory_space<vmem>>, %arg9: memref<1x8x128xf32, #tpu.memory_space<vmem>>) attributes {dimension_semantics = [#tpu.dimension_semantics<parallel>], iteration_bounds = array<i64: 2>, scalar_prefetch = 0 : i64, scratch_operands = 0 : i64, tpu.core_type = #tpu.core_type<tc>, window_params = [{transform_indices = @transform_0, window_bounds = array<i64: 1, 12, 128>}, {pipeline_mode = #tpu.pipeline_mode<synchronous>, transform_indices = @transform_1, window_bounds = array<i64: 384, 256>}, {pipeline_mode = #tpu.pipeline_mode<synchronous>, transform_indices = @transform_2, window_bounds = array<i64: 1, 256>}, {pipeline_mode = #tpu.pipeline_mode<synchronous>, transform_indices = @transform_3, window_bounds = array<i64: 128, 128>}, {pipeline_mode = #tpu.pipeline_mode<synchronous>, transform_indices = @transform_4, window_bounds = array<i64: 1, 128>}, {pipeline_mode = #tpu.pipeline_mode<synchronous>, transform_indices = @transform_5, window_bounds = array<i64: 384, 256>}, {pipeline_mode = #tpu.pipeline_mode<synchronous>, transform_indices = @transform_6, window_bounds = array<i64: 1, 256>}, {pipeline_mode = #tpu.pipeline_mode<synchronous>, transform_indices = @transform_7, window_bounds = array<i64: 128, 128>}, {transform_indices = @transform_8, window_bounds = array<i64: 1, 8, 128>}]} {
    %c0 = arith.constant 0 : index
    %c0_0 = arith.constant 0 : index
    %c0_1 = arith.constant 0 : index
    %0 = vector.load %arg1[%c0, %c0_0, %c0_1] : memref<1x12x128xf32, #tpu.memory_space<vmem>>, vector<1x12x128xf32>
    %1 = vector.shape_cast %0 : vector<1x12x128xf32> to vector<12x128xf32>
    %2 = vector.extract_strided_slice %1 {offsets = [0, 0], sizes = [10, 128], strides = [1, 1]} : vector<12x128xf32> to vector<10x128xf32>
    %3 = vector.extract_strided_slice %1 {offsets = [1, 0], sizes = [10, 128], strides = [1, 1]} : vector<12x128xf32> to vector<10x128xf32>
    %4 = vector.extract_strided_slice %1 {offsets = [2, 0], sizes = [10, 128], strides = [1, 1]} : vector<12x128xf32> to vector<10x128xf32>
    %5 = tpu.concatenate %2, %3, %4 in 1 : vector<10x128xf32>, vector<10x128xf32>, vector<10x128xf32> -> vector<10x384xf32>
    %c0_2 = arith.constant 0 : index
    %c0_3 = arith.constant 0 : index
    %6 = vector.load %arg2[%c0_2, %c0_3] : memref<384x256xf32, #tpu.memory_space<vmem>>, vector<384x256xf32>
    %cst = arith.constant dense<0.000000e+00> : vector<10x256xf32>
    %7 = tpu.matmul %5, %6, %cst {dimension_numbers = #tpu.dot_dimension_numbers<[1], [0], [0], [1], [0, 0, 1, 1], [], []>} : vector<10x384xf32>, vector<384x256xf32>, vector<10x256xf32> -> vector<10x256xf32>
    %c0_4 = arith.constant 0 : index
    %c0_5 = arith.constant 0 : index
    %8 = vector.load %arg3[%c0_4, %c0_5] : memref<1x256xf32, #tpu.memory_space<vmem>>, vector<1x256xf32>
    %9 = vector.broadcast %8 : vector<1x256xf32> to vector<10x256xf32>
    %10 = arith.addf %7, %9 : vector<10x256xf32>
    %11 = vector.extract_strided_slice %1 {offsets = [2, 0], sizes = [10, 128], strides = [1, 1]} : vector<12x128xf32> to vector<10x128xf32>
    %12 = vector.extract_strided_slice %10 {offsets = [0, 0], sizes = [10, 128], strides = [1, 1]} : vector<10x256xf32> to vector<10x128xf32>
    %13 = arith.addf %12, %11 : vector<10x128xf32>
    %14 = vector.extract_strided_slice %10 {offsets = [0, 128], sizes = [10, 128], strides = [1, 1]} : vector<10x256xf32> to vector<10x128xf32>
    %15 = arith.negf %14 : vector<10x128xf32>
    %16 = math.exp %15 : vector<10x128xf32>
    %cst_6 = arith.constant 1.000000e+00 : f32
    %17 = vector.broadcast %cst_6 : f32 to vector<10x128xf32>
    %18 = arith.addf %17, %16 : vector<10x128xf32>
    %19 = arith.divf %17, %18 : vector<10x128xf32>
    %20 = arith.mulf %13, %19 : vector<10x128xf32>
    %c0_7 = arith.constant 0 : index
    %c0_8 = arith.constant 0 : index
    %21 = vector.load %arg4[%c0_7, %c0_8] : memref<128x128xf32, #tpu.memory_space<vmem>>, vector<128x128xf32>
    %cst_9 = arith.constant dense<0.000000e+00> : vector<10x128xf32>
    %22 = tpu.matmul %20, %21, %cst_9 {dimension_numbers = #tpu.dot_dimension_numbers<[1], [0], [0], [1], [0, 0, 1, 1], [], []>} : vector<10x128xf32>, vector<128x128xf32>, vector<10x128xf32> -> vector<10x128xf32>
    %c0_10 = arith.constant 0 : index
    %c0_11 = arith.constant 0 : index
    %23 = vector.load %arg5[%c0_10, %c0_11] : memref<1x128xf32, #tpu.memory_space<vmem>>, vector<1x128xf32>
    %24 = vector.broadcast %23 : vector<1x128xf32> to vector<10x128xf32>
    %25 = arith.addf %22, %24 : vector<10x128xf32>
    %26 = arith.addf %25, %20 : vector<10x128xf32>
    %cst_12 = arith.constant 0.000000e+00 : f32
    %27 = vector.broadcast %cst_12 : f32 to vector<10x128xf32>
    %28 = arith.maximumf %26, %27 : vector<10x128xf32>
    %29 = vector.extract_strided_slice %28 {offsets = [0, 0], sizes = [8, 128], strides = [1, 1]} : vector<10x128xf32> to vector<8x128xf32>
    %30 = vector.extract_strided_slice %28 {offsets = [1, 0], sizes = [8, 128], strides = [1, 1]} : vector<10x128xf32> to vector<8x128xf32>
    %31 = vector.extract_strided_slice %28 {offsets = [2, 0], sizes = [8, 128], strides = [1, 1]} : vector<10x128xf32> to vector<8x128xf32>
    %32 = tpu.concatenate %29, %30, %31 in 1 : vector<8x128xf32>, vector<8x128xf32>, vector<8x128xf32> -> vector<8x384xf32>
    %c0_13 = arith.constant 0 : index
    %c0_14 = arith.constant 0 : index
    %33 = vector.load %arg6[%c0_13, %c0_14] : memref<384x256xf32, #tpu.memory_space<vmem>>, vector<384x256xf32>
    %cst_15 = arith.constant dense<0.000000e+00> : vector<8x256xf32>
    %34 = tpu.matmul %32, %33, %cst_15 {dimension_numbers = #tpu.dot_dimension_numbers<[1], [0], [0], [1], [0, 0, 1, 1], [], []>} : vector<8x384xf32>, vector<384x256xf32>, vector<8x256xf32> -> vector<8x256xf32>
    %c0_16 = arith.constant 0 : index
    %c0_17 = arith.constant 0 : index
    %35 = vector.load %arg7[%c0_16, %c0_17] : memref<1x256xf32, #tpu.memory_space<vmem>>, vector<1x256xf32>
    %36 = vector.broadcast %35 : vector<1x256xf32> to vector<8x256xf32>
    %37 = arith.addf %34, %36 : vector<8x256xf32>
    %38 = vector.extract_strided_slice %28 {offsets = [2, 0], sizes = [8, 128], strides = [1, 1]} : vector<10x128xf32> to vector<8x128xf32>
    %39 = vector.extract_strided_slice %37 {offsets = [0, 0], sizes = [8, 128], strides = [1, 1]} : vector<8x256xf32> to vector<8x128xf32>
    %40 = arith.addf %39, %38 : vector<8x128xf32>
    %41 = vector.extract_strided_slice %37 {offsets = [0, 128], sizes = [8, 128], strides = [1, 1]} : vector<8x256xf32> to vector<8x128xf32>
    %42 = arith.negf %41 : vector<8x128xf32>
    %43 = math.exp %42 : vector<8x128xf32>
    %cst_18 = arith.constant 1.000000e+00 : f32
    %44 = vector.broadcast %cst_18 : f32 to vector<8x128xf32>
    %45 = arith.addf %44, %43 : vector<8x128xf32>
    %46 = arith.divf %44, %45 : vector<8x128xf32>
    %47 = arith.mulf %40, %46 : vector<8x128xf32>
    %48 = arith.mulf %47, %47 : vector<8x128xf32>
    %cst_19 = arith.constant dense<0.000000e+00> : vector<128xf32>
    %49 = vector.multi_reduction <add>, %47, %cst_19 [0] : vector<8x128xf32> to vector<128xf32>
    %50 = vector.shape_cast %49 : vector<128xf32> to vector<1x128xf32>
    %cst_20 = arith.constant dense<0.000000e+00> : vector<128xf32>
    %51 = vector.multi_reduction <add>, %48, %cst_20 [0] : vector<8x128xf32> to vector<128xf32>
    %52 = vector.shape_cast %51 : vector<128xf32> to vector<1x128xf32>
    %53 = tpu.concatenate %50, %52 in 0 : vector<1x128xf32>, vector<1x128xf32> -> vector<2x128xf32>
    %c0_21 = arith.constant 0 : index
    %c0_22 = arith.constant 0 : index
    %54 = vector.load %arg8[%c0_21, %c0_22] : memref<128x128xf32, #tpu.memory_space<vmem>>, vector<128x128xf32>
    %cst_23 = arith.constant dense<0.000000e+00> : vector<2x128xf32>
    %55 = tpu.matmul %53, %54, %cst_23 {dimension_numbers = #tpu.dot_dimension_numbers<[1], [0], [0], [1], [0, 0, 1, 1], [], []>} : vector<2x128xf32>, vector<128x128xf32>, vector<2x128xf32> -> vector<2x128xf32>
    %cst_24 = arith.constant 1.250000e-01 : f32
    %56 = vector.broadcast %cst_24 : f32 to vector<2x128xf32>
    %57 = arith.mulf %55, %56 : vector<2x128xf32>
    %58 = vector.extract_strided_slice %57 {offsets = [0, 0], sizes = [1, 128], strides = [1, 1]} : vector<2x128xf32> to vector<1x128xf32>
    %59 = vector.extract_strided_slice %57 {offsets = [1, 0], sizes = [1, 128], strides = [1, 1]} : vector<2x128xf32> to vector<1x128xf32>
    %60 = arith.mulf %58, %58 : vector<1x128xf32>
    %61 = arith.subf %59, %60 : vector<1x128xf32>
    %cst_25 = arith.constant 0.000000e+00 : f32
    %62 = vector.broadcast %cst_25 : f32 to vector<1x128xf32>
    %63 = arith.maximumf %61, %62 : vector<1x128xf32>
    %64 = math.sqrt %63 : vector<1x128xf32>
    %cst_26 = arith.constant 9.99999997E-7 : f32
    %65 = vector.broadcast %cst_26 : f32 to vector<1x128xf32>
    %66 = arith.addf %64, %65 : vector<1x128xf32>
    %cst_27 = arith.constant 1.000000e+00 : f32
    %67 = vector.broadcast %cst_27 : f32 to vector<1x128xf32>
    %68 = arith.divf %67, %66 : vector<1x128xf32>
    %69 = vector.broadcast %58 : vector<1x128xf32> to vector<8x128xf32>
    %70 = arith.subf %47, %69 : vector<8x128xf32>
    %71 = vector.broadcast %68 : vector<1x128xf32> to vector<8x128xf32>
    %72 = arith.mulf %70, %71 : vector<8x128xf32>
    %c0_28 = arith.constant 0 : index
    %c0_29 = arith.constant 0 : index
    %c0_30 = arith.constant 0 : index
    %73 = vector.load %arg9[%c0_28, %c0_29, %c0_30] : memref<1x8x128xf32, #tpu.memory_space<vmem>>, vector<1x8x128xf32>
    %74 = vector.shape_cast %73 : vector<1x8x128xf32> to vector<8x128xf32>
    %75 = vector.shape_cast %72 : vector<8x128xf32> to vector<1x8x128xf32>
    tpu.vector_store %arg9[%c0_28, %c0_29, %c0_30], %75 {strides = array<i32>} : memref<1x8x128xf32, #tpu.memory_space<vmem>>, vector<1x8x128xf32>,
    return
  }
  func.func @transform_0(%arg0: i32) -> (i32, i32, i32) {
    %c0_i32 = arith.constant 0 : i32
    %c0_i32_0 = arith.constant 0 : i32
    %c0_i32_1 = arith.constant 0 : i32
    return %arg0, %c0_i32, %c0_i32_0 : i32, i32, i32
  }
  func.func @transform_1(%arg0: i32) -> (i32, i32) {
    %c0_i32 = arith.constant 0 : i32
    %c0_i32_0 = arith.constant 0 : i32
    %c0_i32_1 = arith.constant 0 : i32
    return %c0_i32, %c0_i32_0 : i32, i32
  }
  func.func @transform_2(%arg0: i32) -> (i32, i32) {
    %c0_i32 = arith.constant 0 : i32
    %c0_i32_0 = arith.constant 0 : i32
    %c0_i32_1 = arith.constant 0 : i32
    return %c0_i32, %c0_i32_0 : i32, i32
  }
  func.func @transform_3(%arg0: i32) -> (i32, i32) {
    %c0_i32 = arith.constant 0 : i32
    %c0_i32_0 = arith.constant 0 : i32
    %c0_i32_1 = arith.constant 0 : i32
    return %c0_i32, %c0_i32_0 : i32, i32
  }
  func.func @transform_4(%arg0: i32) -> (i32, i32) {
    %c0_i32 = arith.constant 0 : i32
    %c0_i32_0 = arith.constant 0 : i32
    %c0_i32_1 = arith.constant 0 : i32
    return %c0_i32, %c0_i32_0 : i32, i32
  }
  func.func @transform_5(%arg0: i32) -> (i32, i32) {
    %c0_i32 = arith.constant 0 : i32
    %c0_i32_0 = arith.constant 0 : i32
    %c0_i32_1 = arith.constant 0 : i32
    return %c0_i32, %c0_i32_0 : i32, i32
  }
  func.func @transform_6(%arg0: i32) -> (i32, i32) {
    %c0_i32 = arith.constant 0 : i32
    %c0_i32_0 = arith.constant 0 : i32
    %c0_i32_1 = arith.constant 0 : i32
    return %c0_i32, %c0_i32_0 : i32, i32
  }
  func.func @transform_7(%arg0: i32) -> (i32, i32) {
    %c0_i32 = arith.constant 0 : i32
    %c0_i32_0 = arith.constant 0 : i32
    %c0_i32_1 = arith.constant 0 : i32
    return %c0_i32, %c0_i32_0 : i32, i32
  }
  func.func @transform_8(%arg0: i32) -> (i32, i32, i32) {
    %c0_i32 = arith.constant 0 : i32
    %c0_i32_0 = arith.constant 0 : i32
    %c0_i32_1 = arith.constant 0 : i32
    return %arg0, %c0_i32, %c0_i32_0 : i32, i32, i32
  }
}

</mosaic_0001>

<llo_original>
// kernel: stconv_forward.1
$region0: #{stconv_forward.1}
  #allocation0 [shape = 'u32[]', space=smem, size = 0x4, offset = 0x4, fixed_abs, tag = 'smem constant byte address 0x4 - core index']
  #allocation1 [shape = 'u32[144,128]{1,0:T(1,128)}', space=vmem, size = 0x12000, scoped, tag = 'internal scratch']
  %s0 = inlined_call_operand.vmem [shape: f32[2,12,128], index: 0, kind: input, shape index: {}]
  %s1 = inlined_call_operand.vmem [shape: f32[384,256], index: 1, kind: input, shape index: {}]
  %s2 = inlined_call_operand.hbm [shape: f32[1,256], index: 2, kind: input, shape index: {}]
  %s3 = inlined_call_operand.vmem [shape: f32[128,128], index: 3, kind: input, shape index: {}]
  %s4 = inlined_call_operand.vmem [shape: f32[1,128], index: 4, kind: input, shape index: {}]
  %s5 = inlined_call_operand.vmem [shape: f32[384,256], index: 5, kind: input, shape index: {}]
  %s6 = inlined_call_operand.vmem [shape: f32[1,256], index: 6, kind: input, shape index: {}]
  %s7 = inlined_call_operand.hbm [shape: f32[128,128], index: 7, kind: input, shape index: {}]
  %s8 = inlined_call_operand.vmem [shape: f32[2,8,128], index: 8, kind: output, shape index: {}]
  %s9 = sld [smem:[#allocation0]]
  $region73: #{stconv_forward.1} parent=0
    _
  %s11 = ssub.s32 1, %s9
  %s12 = scalar_select 0, %s11, %s9
  $region1: #{stconv_forward.1} parent=0
    #allocation2 [shape = 'u8[1024]{0}', space=vmem, size = 0x400, scoped, tag = 'input window, operand 2, single buffered']
    #allocation3 [shape = 's32[2]{0}', space=sflag, size = 0x8, scoped, tag = 'scoped memory for stconv_forward.1']
    #allocation4 [shape = 'u8[65536]{0}', space=vmem, size = 0x10000, scoped, tag = 'input window, operand 7, single buffered']
    #allocation5 [shape = 's32[1]{0}', space=sflag, size = 0x4, scoped, tag = 'scoped memory for stconv_forward.1']
    %13 = vsyncpa [#allocation3], 0
    %14 = vsyncpa [#allocation5], 0
    loop: start=0, step=1, limit=4
    $region2: #{stconv_forward.1} parent=1 // loop_pre_header
      _
    $region3: #{stconv_forward.1} parent=1 // loop_header
      %s16 = sphi 0, %s20
      %p17 = scmp.ge.s32.totalorder %s16, 4
      %s26 = sphi 0, %s28
      %s29 = sphi 0, %s26
      %s30 = sphi 0, %s29
      %s46 = sphi 0, %s30
      %s50 = sphi 0, %s50
      %s52 = sphi 0, %s50
      %s53 = sphi 0, %s52
      %s67 = sphi 0, %s53
      %s71 = sphi 0, %s71
      %s73 = sphi 0, %s71
      %s74 = sphi 0, %s73
      %s88 = sphi 0, %s74
      %s92 = sphi 0, %s92
      %s94 = sphi 0, %s92
      %s95 = sphi 0, %s94
      %s109 = sphi 0, %s95
      %s113 = sphi 0, %s113
      %s115 = sphi 0, %s113
      %s116 = sphi 0, %s115
      %s130 = sphi 0, %s116
      %s134 = sphi 0, %s134
      %s136 = sphi 0, %s134
      %s137 = sphi 0, %s136
      %s151 = sphi 0, %s137
      %s155 = sphi 0, %s155
      %s157 = sphi 0, %s155
      %s158 = sphi 0, %s157
      %s172 = sphi 0, %s158
      %s176 = sphi 0, %s176
      %s178 = sphi 0, %s176
      %s179 = sphi 0, %s178
      %s193 = sphi 0, %s179
      %s199 = sphi 0, %s201
      %s202 = sphi 0, %s199
      %s203 = sphi 0, %s202
      %s219 = sphi 0, %s203
    $region4: #{stconv_forward.1} parent=1 // loop_header_branch
      %19 = sbr.rel (%p17) target = $region8
    $region5: #{stconv_forward.1} parent=1 // loop_body
      %s21 = ssub.s32 %s16, 1
      %s22 = ssub.s32 %s16, 2
      %s23 = sadd.s32 %s16, 1
      %s24 = ssub.s32 %s16, %s23
      %p25 = scmp.eq.s32.totalorder %s24, 0
      %s27 = sadd.s32 %s26, 1
      %s28 = scalar_select %p25, %s26, %s27
      %p31 = pneg %p25
      %p32 = scmp.eq.s32.totalorder %s16, 1
      %p33 = por %p31, %p32
      %p34 = scmp.ne.s32.totalorder %s26, %s29
      %p35 = scmp.eq.s32.totalorder %s16, 0
      %p36 = por %p34, %p35
      %p37 = scmp.ne.s32.totalorder %s26, %s29
      %p38 = scmp.eq.s32.totalorder %s21, 1
      %p39 = por %p37, %p38
      %p40 = scmp.ne.s32.totalorder %s29, %s30
      %p41 = scmp.eq.s32.totalorder %s21, 0
      %p42 = por %p40, %p41
      %p43 = scmp.ne.s32.totalorder %s29, %s30
      %p44 = scmp.eq.s32.totalorder %s22, 1
      %p45 = por %p43, %p44
      %p47 = scmp.ne.s32.totalorder %s30, %s46
      %p48 = scmp.eq.s32.totalorder %s22, 0
      %p49 = por %p47, %p48
      %s51 = sadd.s32 %s50, 1
      %p54 = scmp.eq.s32.totalorder %s16, 1
      %p55 = scmp.ne.s32.totalorder %s50, %s52
      %p56 = scmp.eq.s32.totalorder %s16, 0
      %p57 = por %p55, %p56
      %p58 = scmp.ne.s32.totalorder %s50, %s52
      %p59 = scmp.eq.s32.totalorder %s21, 1
      %p60 = por %p58, %p59
      %p61 = scmp.ne.s32.totalorder %s52, %s53
      %p62 = scmp.eq.s32.totalorder %s21, 0
      %p63 = por %p61, %p62
      %p64 = scmp.ne.s32.totalorder %s52, %s53
      %p65 = scmp.eq.s32.totalorder %s22, 1
      %p66 = por %p64, %p65
      %p68 = scmp.ne.s32.totalorder %s53, %s67
      %p69 = scmp.eq.s32.totalorder %s22, 0
      %p70 = por %p68, %p69
      %s72 = sadd.s32 %s71, 1
      %p75 = scmp.eq.s32.totalorder %s16, 1
      %p76 = scmp.ne.s32.totalorder %s71, %s73
      %p77 = scmp.eq.s32.totalorder %s16, 0
      %p78 = por %p76, %p77
      %p79 = scmp.ne.s32.totalorder %s71, %s73
      %p80 = scmp.eq.s32.totalorder %s21, 1
      %p81 = por %p79, %p80
      %p82 = scmp.ne.s32.totalorder %s73, %s74
      %p83 = scmp.eq.s32.totalorder %s21, 0
      %p84 = por %p82, %p83
      %p85 = scmp.ne.s32.totalorder %s73, %s74
      %p86 = scmp.eq.s32.totalorder %s22, 1
      %p87 = por %p85, %p86
      %p89 = scmp.ne.s32.totalorder %s74, %s88
      %p90 = scmp.eq.s32.totalorder %s22, 0
      %p91 = por %p89, %p90
      %s93 = sadd.s32 %s92, 1
      %p96 = scmp.eq.s32.totalorder %s16, 1
      %p97 = scmp.ne.s32.totalorder %s92, %s94
      %p98 = scmp.eq.s32.totalorder %s16, 0
      %p99 = por %p97, %p98
      %p100 = scmp.ne.s32.totalorder %s92, %s94
      %p101 = scmp.eq.s32.totalorder %s21, 1
      %p102 = por %p100, %p101
      %p103 = scmp.ne.s32.totalorder %s94, %s95
      %p104 = scmp.eq.s32.totalorder %s21, 0
      %p105 = por %p103, %p104
      %p106 = scmp.ne.s32.totalorder %s94, %s95
      %p107 = scmp.eq.s32.totalorder %s22, 1
      %p108 = por %p106, %p107
      %p110 = scmp.ne.s32.totalorder %s95, %s109
      %p111 = scmp.eq.s32.totalorder %s22, 0
      %p112 = por %p110, %p111
      %s114 = sadd.s32 %s113, 1
      %p117 = scmp.eq.s32.totalorder %s16, 1
      %p118 = scmp.ne.s32.totalorder %s113, %s115
      %p119 = scmp.eq.s32.totalorder %s16, 0
      %p120 = por %p118, %p119
      %p121 = scmp.ne.s32.totalorder %s113, %s115
      %p122 = scmp.eq.s32.totalorder %s21, 1
      %p123 = por %p121, %p122
      %p124 = scmp.ne.s32.totalorder %s115, %s116
      %p125 = scmp.eq.s32.totalorder %s21, 0
      %p126 = por %p124, %p125
      %p127 = scmp.ne.s32.totalorder %s115, %s116
      %p128 = scmp.eq.s32.totalorder %s22, 1
      %p129 = por %p127, %p128
      %p131 = scmp.ne.s32.totalorder %s116, %s130
      %p132 = scmp.eq.s32.totalorder %s22, 0
      %p133 = por %p131, %p132
      %s135 = sadd.s32 %s134, 1
      %p138 = scmp.eq.s32.totalorder %s16, 1
      %p139 = scmp.ne.s32.totalorder %s134, %s136
      %p140 = scmp.eq.s32.totalorder %s16, 0
      %p141 = por %p139, %p140
      %p142 = scmp.ne.s32.totalorder %s134, %s136
      %p143 = scmp.eq.s32.totalorder %s21, 1
      %p144 = por %p142, %p143
      %p145 = scmp.ne.s32.totalorder %s136, %s137
      %p146 = scmp.eq.s32.totalorder %s21, 0
      %p147 = por %p145, %p146
      %p148 = scmp.ne.s32.totalorder %s136, %s137
      %p149 = scmp.eq.s32.totalorder %s22, 1
      %p150 = por %p148, %p149
      %p152 = scmp.ne.s32.totalorder %s137, %s151
      %p153 = scmp.eq.s32.totalorder %s22, 0
      %p154 = por %p152, %p153
      %s156 = sadd.s32 %s155, 1
      %p159 = scmp.eq.s32.totalorder %s16, 1
      %p160 = scmp.ne.s32.totalorder %s155, %s157
      %p161 = scmp.eq.s32.totalorder %s16, 0
      %p162 = por %p160, %p161
      %p163 = scmp.ne.s32.totalorder %s155, %s157
      %p164 = scmp.eq.s32.totalorder %s21, 1
      %p165 = por %p163, %p164
      %p166 = scmp.ne.s32.totalorder %s157, %s158
      %p167 = scmp.eq.s32.totalorder %s21, 0
      %p168 = por %p166, %p167
      %p169 = scmp.ne.s32.totalorder %s157, %s158
      %p170 = scmp.eq.s32.totalorder %s22, 1
      %p171 = por %p169, %p170
      %p173 = scmp.ne.s32.totalorder %s158, %s172
      %p174 = scmp.eq.s32.totalorder %s22, 0
      %p175 = por %p173, %p174
      %s177 = sadd.s32 %s176, 1
      %p180 = scmp.eq.s32.totalorder %s16, 1
      %p181 = scmp.ne.s32.totalorder %s176, %s178
      %p182 = scmp.eq.s32.totalorder %s16, 0
      %p183 = por %p181, %p182
      %p184 = scmp.ne.s32.totalorder %s176, %s178
      %p185 = scmp.eq.s32.totalorder %s21, 1
      %p186 = por %p184, %p185
      %p187 = scmp.ne.s32.totalorder %s178, %s179
      %p188 = scmp.eq.s32.totalorder %s21, 0
      %p189 = por %p187, %p188
      %p190 = scmp.ne.s32.totalorder %s178, %s179
      %p191 = scmp.eq.s32.totalorder %s22, 1
      %p192 = por %p190, %p191
      %p194 = scmp.ne.s32.totalorder %s179, %s193
      %p195 = scmp.eq.s32.totalorder %s22, 0
      %p196 = por %p194, %p195
      %s197 = ssub.s32 %s16, %s23
      %p198 = scmp.eq.s32.totalorder %s197, 0
      %s200 = sadd.s32 %s199, 1
      %s201 = scalar_select %p198, %s199, %s200
      %p204 = pneg %p198
      %p205 = scmp.eq.s32.totalorder %s16, 1
      %p206 = por %p204, %p205
      %p207 = scmp.ne.s32.totalorder %s199, %s202
      %p208 = scmp.eq.s32.totalorder %s16, 0
      %p209 = por %p207, %p208
      %p210 = scmp.ne.s32.totalorder %s199, %s202
      %p211 = scmp.eq.s32.totalorder %s21, 1
      %p212 = por %p210, %p211
      %p213 = scmp.ne.s32.totalorder %s202, %s203
      %p214 = scmp.eq.s32.totalorder %s21, 0
      %p215 = por %p213, %p214
      %p216 = scmp.ne.s32.totalorder %s202, %s203
      %p217 = scmp.eq.s32.totalorder %s22, 1
      %p218 = por %p216, %p217
      %p220 = scmp.ne.s32.totalorder %s203, %s219
      %p221 = scmp.eq.s32.totalorder %s22, 0
      %p222 = por %p220, %p221
      %p223 = scmp.le.s32.totalorder 1, %s16
      %p224 = scmp.lt.s32.totalorder %s16, 3
      %p225 = pnand %p223, %p224
      %p226 = pneg %p225
      // Predicated region
      $region9: #{stconv_forward.1} parent=5 // pred_check
        _
      $region10: #{stconv_forward.1} parent=5 // pred_check_branch
        %228 = sbr.rel (%p225) target = $region12
      $region11: #{stconv_forward.1} parent=5 // pred_region
        %s229 = ssub.s32 %s16, 1
        // Predicated region
        $region13: #{stconv_forward.1} parent=11 // pred_check
          %p230 = pneg %p63
        $region14: #{stconv_forward.1} parent=11 // pred_check_branch
          %232 = sbr.rel (%p230) target = $region16
        $region15: #{stconv_forward.1} parent=11 // pred_region
          _
        $region16: #{stconv_forward.1} parent=11 // pred_fallthru
          _
        // Predicated region
        $region17: #{stconv_forward.1} parent=11 // pred_check
          %p233 = pneg %p84
        $region18: #{stconv_forward.1} parent=11 // pred_check_branch
          %235 = sbr.rel (%p233) target = $region20
        $region19: #{stconv_forward.1} parent=11 // pred_region
          %s237 = ssub.s32 32, 32
          %238 = vsyncadd [#allocation3], %s237
          %s240 = sshll.u32 [#allocation2], 4
          %s241 = int_to_ptr.vmem [resolvable:$true] %s240
          %243 = dma.hbm_to_vmem [thread:$0]  %s2, 32, %s241, [#allocation3]
        $region20: #{stconv_forward.1} parent=11 // pred_fallthru
          _
        // Predicated region
        $region21: #{stconv_forward.1} parent=11 // pred_check
          %p244 = pneg %p105
        $region22: #{stconv_forward.1} parent=11 // pred_check_branch
          %246 = sbr.rel (%p244) target = $region24
        $region23: #{stconv_forward.1} parent=11 // pred_region
          _
        $region24: #{stconv_forward.1} parent=11 // pred_fallthru
          _
        // Predicated region
        $region25: #{stconv_forward.1} parent=11 // pred_check
          %p247 = pneg %p126
        $region26: #{stconv_forward.1} parent=11 // pred_check_branch
          %249 = sbr.rel (%p247) target = $region28
        $region27: #{stconv_forward.1} parent=11 // pred_region
          _
        $region28: #{stconv_forward.1} parent=11 // pred_fallthru
          _
        // Predicated region
        $region29: #{stconv_forward.1} parent=11 // pred_check
          %p250 = pneg %p147
        $region30: #{stconv_forward.1} parent=11 // pred_check_branch
          %252 = sbr.rel (%p250) target = $region32
        $region31: #{stconv_forward.1} parent=11 // pred_region
          _
        $region32: #{stconv_forward.1} parent=11 // pred_fallthru
          _
        // Predicated region
        $region33: #{stconv_forward.1} parent=11 // pred_check
          %p253 = pneg %p168
        $region34: #{stconv_forward.1} parent=11 // pred_check_branch
          %255 = sbr.rel (%p253) target = $region36
        $region35: #{stconv_forward.1} parent=11 // pred_region
          _
        $region36: #{stconv_forward.1} parent=11 // pred_fallthru
          _
        // Predicated region
        $region37: #{stconv_forward.1} parent=11 // pred_check
          %p256 = pneg %p189
        $region38: #{stconv_forward.1} parent=11 // pred_check_branch
          %258 = sbr.rel (%p256) target = $region40
        $region39: #{stconv_forward.1} parent=11 // pred_region
          %s260 = ssub.s32 2048, 2048
          %261 = vsyncadd [#allocation5], %s260
          %s262 = sshll.u32 [#allocation4], 4
          %s263 = int_to_ptr.vmem [resolvable:$true] %s262
          %268 = dma.hbm_to_vmem [thread:$0]  %s7, 2048, %s263, [#allocation5], 128, 128, 8
        $region40: #{stconv_forward.1} parent=11 // pred_fallthru
          _
      $region12: #{stconv_forward.1} parent=5 // pred_fallthru
        _
      %p269 = scmp.lt.s32.totalorder %s16, 2
      // Predicated region
      $region41: #{stconv_forward.1} parent=5 // pred_check
        %p270 = pneg %p269
      $region42: #{stconv_forward.1} parent=5 // pred_check_branch
        %272 = sbr.rel (%p270) target = $region44
      $region43: #{stconv_forward.1} parent=5 // pred_region
        // Predicated region
        $region45: #{stconv_forward.1} parent=43 // pred_check
          %p273 = pneg %p36
        $region46: #{stconv_forward.1} parent=43 // pred_check_branch
          %275 = sbr.rel (%p273) target = $region48
        $region47: #{stconv_forward.1} parent=43 // pred_region
          %p276 = scmp.lt.s32.totalorder %s16, 1
          %s277 = scalar_select %p276, %s16, 1
          %s278 = smul.addr %s277, 2
          %s279 = smul.addr %s278, 8
          %s280 = scalar_lea.vmem %s0, %s279
        $region48: #{stconv_forward.1} parent=43 // pred_fallthru
          _
      $region44: #{stconv_forward.1} parent=5 // pred_fallthru
        _
      %p281 = scmp.le.s32.totalorder 1, %s16
      %p282 = scmp.lt.s32.totalorder %s16, 3
      %p283 = pnand %p281, %p282
      %p284 = pneg %p283
      // Predicated region
      $region49: #{stconv_forward.1} parent=5 // pred_check
        _
      $region50: #{stconv_forward.1} parent=5 // pred_check_branch
        %286 = sbr.rel (%p283) target = $region52
      $region51: #{stconv_forward.1} parent=5 // pred_region
        %s287 = ssub.s32 %s16, 1
        // Predicated region
        $region53: #{stconv_forward.1} parent=51 // pred_check
          %p288 = pneg %p84
        $region54: #{stconv_forward.1} parent=51 // pred_check_branch
          %290 = sbr.rel (%p288) target = $region56
        $region55: #{stconv_forward.1} parent=51 // pred_region
          %291 = dma.done [#allocation3], 32
        $region56: #{stconv_forward.1} parent=51 // pred_fallthru
          _
        // Predicated region
        $region57: #{stconv_forward.1} parent=51 // pred_check
          %p292 = pneg %p189
        $region58: #{stconv_forward.1} parent=51 // pred_check_branch
          %294 = sbr.rel (%p292) target = $region60
        $region59: #{stconv_forward.1} parent=51 // pred_region
          %295 = dma.done [#allocation5], 2048
        $region60: #{stconv_forward.1} parent=51 // pred_fallthru
          _
        %p296 = scmp.lt.s32.totalorder %s21, 1
        %s297 = scalar_select %p296, %s21, 1
        %s298 = smul.addr %s297, 2
        %s299 = smul.addr %s298, 8
        %s300 = scalar_lea.vmem %s0, %s299
        %p301 = pneg %p42
        %p302 = pneg %p39
        %p303 = pneg %p63
        %p304 = pneg %p60
        %p305 = pneg %p84
        %p306 = pneg %p81
        %p307 = pneg %p105
        %p308 = pneg %p102
        %p309 = pneg %p126
        %p310 = pneg %p123
        %p311 = pneg %p147
        %p312 = pneg %p144
        %p313 = pneg %p168
        %p314 = pneg %p165
        %p315 = pneg %p189
        %p316 = pneg %p186
        %p317 = pneg %p215
        %p318 = pneg %p212
        %p319 = scmp.lt.s32.totalorder %s21, 1
        %s320 = scalar_select %p319, %s21, 1
        %s321 = smul.addr %s320, 8
        %s322 = scalar_lea.vmem %s8, %s321
        %p323 = scmp.lt.s32.totalorder %s21, 1
        %s324 = scalar_select %p323, %s21, 1
        %s325 = smul.addr %s324, 2
        %s326 = smul.addr %s325, 8
        %s327 = scalar_lea.vmem %s0, %s326
        %p328 = scmp.lt.s32.totalorder %s21, 1
        %s329 = scalar_select %p328, %s21, 1
        %s330 = smul.addr %s329, 8
        %s331 = scalar_lea.vmem %s8, %s330
        %v332 = vld [vmem:[%s327] sm:$0xff]
        %v333 = vld [vmem:[%s327 + $0x8] sm:$0xf]
        %vm336 = vcmask 1046528
        %v337 = vrot.slane %v332, 1
        %v338 = vrot.slane %v333, 1
        %v339 = vsel %vm336, %v337, %v338
        %vm342 = vcmask 1045504
        %v343 = vrot.slane %v332, 2
        %v344 = vrot.slane %v333, 2
        %v345 = vsel %vm342, %v343, %v344
        %v348 = vld [vmem:[%s1] sm:$0xff]
        %v349 = vld [vmem:[%s1 + $0x8] sm:$0xff]
        %v350 = vld [vmem:[%s1 + $0x10] sm:$0xff]
        %v351 = vld [vmem:[%s1 + $0x18] sm:$0xff]
        %v352 = vld [vmem:[%s1 + $0x20] sm:$0xff]
        %v353 = vld [vmem:[%s1 + $0x28] sm:$0xff]
        %v354 = vld [vmem:[%s1 + $0x30] sm:$0xff]
        %v355 = vld [vmem:[%s1 + $0x38] sm:$0xff]
        %v356 = vld [vmem:[%s1 + $0x40] sm:$0xff]
        %v357 = vld [vmem:[%s1 + $0x48] sm:$0xff]
        %v358 = vld [vmem:[%s1 + $0x50] sm:$0xff]
        %v359 = vld [vmem:[%s1 + $0x58] sm:$0xff]
        %v360 = vld [vmem:[%s1 + $0x60] sm:$0xff]
        %v361 = vld [vmem:[%s1 + $0x68] sm:$0xff]
        %v362 = vld [vmem:[%s1 + $0x70] sm:$0xff]
        %v363 = vld [vmem:[%s1 + $0x78] sm:$0xff]
        %v364 = vld [vmem:[%s1 + $0x80] sm:$0xff]
        %v365 = vld [vmem:[%s1 + $0x88] sm:$0xff]
        %v366 = vld [vmem:[%s1 + $0x90] sm:$0xff]
        %v367 = vld [vmem:[%s1 + $0x98] sm:$0xff]
        %v368 = vld [vmem:[%s1 + $0xa0] sm:$0xff]
        %v369 = vld [vmem:[%s1 + $0xa8] sm:$0xff]
        %v370 = vld [vmem:[%s1 + $0xb0] sm:$0xff]
        %v371 = vld [vmem:[%s1 + $0xb8] sm:$0xff]
        %v372 = vld [vmem:[%s1 + $0xc0] sm:$0xff]
        %v373 = vld [vmem:[%s1 + $0xc8] sm:$0xff]
        %v374 = vld [vmem:[%s1 + $0xd0] sm:$0xff]
        %v375 = vld [vmem:[%s1 + $0xd8] sm:$0xff]
        %v376 = vld [vmem:[%s1 + $0xe0] sm:$0xff]
        %v377 = vld [vmem:[%s1 + $0xe8] sm:$0xff]
        %v378 = vld [vmem:[%s1 + $0xf0] sm:$0xff]
        %v379 = vld [vmem:[%s1 + $0xf8] sm:$0xff]
        %v380 = vld [vmem:[%s1 + $0x100] sm:$0xff]
        %v381 = vld [vmem:[%s1 + $0x108] sm:$0xff]
        %v382 = vld [vmem:[%s1 + $0x110] sm:$0xff]
        %v383 = vld [vmem:[%s1 + $0x118] sm:$0xff]
        %v384 = vld [vmem:[%s1 + $0x120] sm:$0xff]
        %v385 = vld [vmem:[%s1 + $0x128] sm:$0xff]
        %v386 = vld [vmem:[%s1 + $0x130] sm:$0xff]
        %v387 = vld [vmem:[%s1 + $0x138] sm:$0xff]
        %v388 = vld [vmem:[%s1 + $0x140] sm:$0xff]
        %v389 = vld [vmem:[%s1 + $0x148] sm:$0xff]
        %v390 = vld [vmem:[%s1 + $0x150] sm:$0xff]
        %v391 = vld [vmem:[%s1 + $0x158] sm:$0xff]
        %v392 = vld [vmem:[%s1 + $0x160] sm:$0xff]
        %v393 = vld [vmem:[%s1 + $0x168] sm:$0xff]
        %v394 = vld [vmem:[%s1 + $0x170] sm:$0xff]
        %v395 = vld [vmem:[%s1 + $0x178] sm:$0xff]
        %v396 = vld [vmem:[%s1 + $0x180] sm:$0xff]
        %v397 = vld [vmem:[%s1 + $0x188] sm:$0xff]
        %v398 = vld [vmem:[%s1 + $0x190] sm:$0xff]
        %v399 = vld [vmem:[%s1 + $0x198] sm:$0xff]
        %v400 = vld [vmem:[%s1 + $0x1a0] sm:$0xff]
        %v401 = vld [vmem:[%s1 + $0x1a8] sm:$0xff]
        %v402 = vld [vmem:[%s1 + $0x1b0] sm:$0xff]
        %v403 = vld [vmem:[%s1 + $0x1b8] sm:$0xff]
        %v404 = vld [vmem:[%s1 + $0x1c0] sm:$0xff]
        %v405 = vld [vmem:[%s1 + $0x1c8] sm:$0xff]
        %v406 = vld [vmem:[%s1 + $0x1d0] sm:$0xff]
        %v407 = vld [vmem:[%s1 + $0x1d8] sm:$0xff]
        %v408 = vld [vmem:[%s1 + $0x1e0] sm:$0xff]
        %v409 = vld [vmem:[%s1 + $0x1e8] sm:$0xff]
        %v410 = vld [vmem:[%s1 + $0x1f0] sm:$0xff]
        %v411 = vld [vmem:[%s1 + $0x1f8] sm:$0xff]
        %v412 = vld [vmem:[%s1 + $0x200] sm:$0xff]
        %v413 = vld [vmem:[%s1 + $0x208] sm:$0xff]
        %v414 = vld [vmem:[%s1 + $0x210] sm:$0xff]
        %v415 = vld [vmem:[%s1 + $0x218] sm:$0xff]
        %v416 = vld [vmem:[%s1 + $0x220] sm:$0xff]
        %v417 = vld [vmem:[%s1 + $0x228] sm:$0xff]
        %v418 = vld [vmem:[%s1 + $0x230] sm:$0xff]
        %v419 = vld [vmem:[%s1 + $0x238] sm:$0xff]
        %v420 = vld [vmem:[%s1 + $0x240] sm:$0xff]
        %v421 = vld [vmem:[%s1 + $0x248] sm:$0xff]
        %v422 = vld [vmem:[%s1 + $0x250] sm:$0xff]
        %v423 = vld [vmem:[%s1 + $0x258] sm:$0xff]
        %v424 = vld [vmem:[%s1 + $0x260] sm:$0xff]
        %v425 = vld [vmem:[%s1 + $0x268] sm:$0xff]
        %v426 = vld [vmem:[%s1 + $0x270] sm:$0xff]
        %v427 = vld [vmem:[%s1 + $0x278] sm:$0xff]
        %v428 = vld [vmem:[%s1 + $0x280] sm:$0xff]
        %v429 = vld [vmem:[%s1 + $0x288] sm:$0xff]
        %v430 = vld [vmem:[%s1 + $0x290] sm:$0xff]
        %v431 = vld [vmem:[%s1 + $0x298] sm:$0xff]
        %v432 = vld [vmem:[%s1 + $0x2a0] sm:$0xff]
        %v433 = vld [vmem:[%s1 + $0x2a8] sm:$0xff]
        %v434 = vld [vmem:[%s1 + $0x2b0] sm:$0xff]
        %v435 = vld [vmem:[%s1 + $0x2b8] sm:$0xff]
        %v436 = vld [vmem:[%s1 + $0x2c0] sm:$0xff]
        %v437 = vld [vmem:[%s1 + $0x2c8] sm:$0xff]
        %v438 = vld [vmem:[%s1 + $0x2d0] sm:$0xff]
        %v439 = vld [vmem:[%s1 + $0x2d8] sm:$0xff]
        %v440 = vld [vmem:[%s1 + $0x2e0] sm:$0xff]
        %v441 = vld [vmem:[%s1 + $0x2e8] sm:$0xff]
        %v442 = vld [vmem:[%s1 + $0x2f0] sm:$0xff]
        %v443 = vld [vmem:[%s1 + $0x2f8] sm:$0xff]
        %v444 = vld [vmem:[#allocation2] sm:$0x3]
        %v446 = vlaneseq
        %v447 = vshrl.u32 %v446, 7
        %v448 = vsub.s32 0, %v447
        %v449 = vrot.slane %v444, %v448
        %v450 = vlaneseq
        %v451 = vshrl.u32 %v450, 7
        %v452 = vsub.s32 1, %v451
        %v453 = vrot.slane %v444, %v452
        %456 = vmatprep.subr.mxu0 %v349
        %457 = vmatpush1.msra.mxu0 %v348
        %458 = vmatprep.subr.mxu0 %v351
        %459 = vmatpush1.msra.mxu0 %v350
        %460 = vmatprep.subr.mxu0 %v353
        %461 = vmatpush1.msra.mxu0 %v352
        %462 = vmatprep.subr.mxu0 %v355
        %463 = vmatpush1.msra.mxu0 %v354
        %464 = vmatprep.subr.mxu0 %v357
        %465 = vmatpush1.msra.mxu0 %v356
        %466 = vmatprep.subr.mxu0 %v359
        %467 = vmatpush1.msra.mxu0 %v358
        %468 = vmatprep.subr.mxu0 %v361
        %469 = vmatpush1.msra.mxu0 %v360
        %470 = vmatprep.subr.mxu0 %v363
        %471 = vmatpush1.msra.mxu0 %v362
        %472 = vmatprep.subr.mxu0 %v365
        %473 = vmatpush1.msra.mxu0 %v364
        %474 = vmatprep.subr.mxu0 %v367
        %475 = vmatpush1.msra.mxu0 %v366
        %476 = vmatprep.subr.mxu0 %v369
        %477 = vmatpush1.msra.mxu0 %v368
        %478 = vmatprep.subr.mxu0 %v371
        %479 = vmatpush1.msra.mxu0 %v370
        %480 = vmatprep.subr.mxu0 %v373
        %481 = vmatpush1.msra.mxu0 %v372
        %482 = vmatprep.subr.mxu0 %v375
        %483 = vmatpush1.msra.mxu0 %v374
        %484 = vmatprep.subr.mxu0 %v377
        %485 = vmatpush1.msra.mxu0 %v376
        %486 = vmatprep.subr.mxu0 %v379
        %487 = vmatpush1.msra.mxu0 %v378
        %488 = vmatprep.subr.mxu0 %v381
        %489 = vmatpush1.msra.mxu0 %v380
        %490 = vmatprep.subr.mxu0 %v383
        %491 = vmatpush1.msra.mxu0 %v382
        %492 = vmatprep.subr.mxu0 %v385
        %493 = vmatpush1.msra.mxu0 %v384
        %494 = vmatprep.subr.mxu0 %v387
        %495 = vmatpush1.msra.mxu0 %v386
        %496 = vmatprep.subr.mxu0 %v389
        %497 = vmatpush1.msra.mxu0 %v388
        %498 = vmatprep.subr.mxu0 %v391
        %499 = vmatpush1.msra.mxu0 %v390
        %500 = vmatprep.subr.mxu0 %v393
        %501 = vmatpush1.msra.mxu0 %v392
        %502 = vmatprep.subr.mxu0 %v395
        %503 = vmatpush1.msra.mxu0 %v394
        %504 = vmatprep.subr.mxu0 %v397
        %505 = vmatpush1.msra.mxu0 %v396
        %506 = vmatprep.subr.mxu0 %v399
        %507 = vmatpush1.msra.mxu0 %v398
        %508 = vmatprep.subr.mxu0 %v401
        %509 = vmatpush1.msra.mxu0 %v400
        %510 = vmatprep.subr.mxu0 %v403
        %511 = vmatpush1.msra.mxu0 %v402
        %512 = vmatprep.subr.mxu0 %v405
        %513 = vmatpush1.msra.mxu0 %v404
        %514 = vmatprep.subr.mxu0 %v407
        %515 = vmatpush1.msra.mxu0 %v406
        %516 = vmatprep.subr.mxu0 %v409
        %517 = vmatpush1.msra.mxu0 %v408
        %518 = vmatprep.subr.mxu0 %v411
        %519 = vmatpush1.msra.mxu0 %v410
        %520 = vmatprep.mubr.f32.mxu0 %v339
        %521 = vmatmul.mubr.f32.gmra.mrb[0].mxu0 %v332
        %v522 = vpop.f32.mrb[0].mxu0
        %v523 = vadd.f32 %v449, %v522
        %v524 = vpop.f32.mrb[0].mxu0
        %v525 = vadd.f32 %v453, %v524
        %526 = vmatprep.mubr.f32.mxu0 %v338
        %527 = vmatmul.mubr.f32.gmra.mrb[0].mxu0 %v333
        %v528 = vpop.f32.mrb[0].mxu0
        %v529 = vadd.f32 %v449, %v528
        %v530 = vpop.f32.mrb[0].mxu0
        %v531 = vadd.f32 %v453, %v530
        %532 = vdwg.mxu0
        %533 = vmatprep.subr.mxu0 %v413
        %534 = vmatpush1.msra.mxu0 %v412
        %535 = vmatprep.subr.mxu0 %v415
        %536 = vmatpush1.msra.mxu0 %v414
        %537 = vmatprep.subr.mxu0 %v417
        %538 = vmatpush1.msra.mxu0 %v416
        %539 = vmatprep.subr.mxu0 %v419
        %540 = vmatpush1.msra.mxu0 %v418
        %541 = vmatprep.subr.mxu0 %v421
        %542 = vmatpush1.msra.mxu0 %v420
        %543 = vmatprep.subr.mxu0 %v423
        %544 = vmatpush1.msra.mxu0 %v422
        %545 = vmatprep.subr.mxu0 %v425
        %546 = vmatpush1.msra.mxu0 %v424
        %547 = vmatprep.subr.mxu0 %v427
        %548 = vmatpush1.msra.mxu0 %v426
        %549 = vmatprep.subr.mxu0 %v429
        %550 = vmatpush1.msra.mxu0 %v428
        %551 = vmatprep.subr.mxu0 %v431
        %552 = vmatpush1.msra.mxu0 %v430
        %553 = vmatprep.subr.mxu0 %v433
        %554 = vmatpush1.msra.mxu0 %v432
        %555 = vmatprep.subr.mxu0 %v435
        %556 = vmatpush1.msra.mxu0 %v434
        %557 = vmatprep.subr.mxu0 %v437
        %558 = vmatpush1.msra.mxu0 %v436
        %559 = vmatprep.subr.mxu0 %v439
        %560 = vmatpush1.msra.mxu0 %v438
        %561 = vmatprep.subr.mxu0 %v441
        %562 = vmatpush1.msra.mxu0 %v440
        %563 = vmatprep.subr.mxu0 %v443
        %564 = vmatpush1.msra.mxu0 %v442
        %565 = vmatprep.subr.mxu0 0.0
        %566 = vmatpush1.msra.mxu0 0.0
        %567 = vmatprep.subr.mxu0 0.0
        %568 = vmatpush1.msra.mxu0 0.0
        %569 = vmatprep.subr.mxu0 0.0
        %570 = vmatpush1.msra.mxu0 0.0
        %571 = vmatprep.subr.mxu0 0.0
        %572 = vmatpush1.msra.mxu0 0.0
        %573 = vmatprep.subr.mxu0 0.0
        %574 = vmatpush1.msra.mxu0 0.0
        %575 = vmatprep.subr.mxu0 0.0
        %576 = vmatpush1.msra.mxu0 0.0
        %577 = vmatprep.subr.mxu0 0.0
        %578 = vmatpush1.msra.mxu0 0.0
        %579 = vmatprep.subr.mxu0 0.0
        %580 = vmatpush1.msra.mxu0 0.0
        %581 = vmatprep.subr.mxu0 0.0
        %582 = vmatpush1.msra.mxu0 0.0
        %583 = vmatprep.subr.mxu0 0.0
        %584 = vmatpush1.msra.mxu0 0.0
        %585 = vmatprep.subr.mxu0 0.0
        %586 = vmatpush1.msra.mxu0 0.0
        %587 = vmatprep.subr.mxu0 0.0
        %588 = vmatpush1.msra.mxu0 0.0
        %589 = vmatprep.subr.mxu0 0.0
        %590 = vmatpush1.msra.mxu0 0.0
        %591 = vmatprep.subr.mxu0 0.0
        %592 = vmatpush1.msra.mxu0 0.0
        %593 = vmatprep.subr.mxu0 0.0
        %594 = vmatpush1.msra.mxu0 0.0
        %595 = vmatprep.subr.mxu0 0.0
        %596 = vmatpush1.msra.mxu0 0.0
        %597 = vmatprep.mubr.f32.mxu0 0.0
        %598 = vmatmul.mubr.f32.gmra.mrb[0].mxu0 %v345
        %v599 = vpop.f32.mrb[0].mxu0
        %v600 = vadd.f32 %v523, %v599
        %v601 = vpop.f32.mrb[0].mxu0
        %v602 = vadd.f32 %v525, %v601
        %603 = vmatprep.mubr.f32.mxu0 0.0
        %604 = vmatmul.mubr.f32.gmra.mrb[0].mxu0 %v344
        %v605 = vpop.f32.mrb[0].mxu0
        %v606 = vadd.f32 %v529, %v605
        %v607 = vpop.f32.mrb[0].mxu0
        %v608 = vadd.f32 %v531, %v607
        %609 = vdwg.mxu0
        %v610 = vadd.f32 %v600, %v345
        %v611 = vadd.f32 %v606, %v344
        %v612 = vxor.u32 %v602, 2147483648
        %v613 = vxor.u32 %v608, 2147483648
        %v614 = vmul.f32 %v612, 1.442695
        %v615 = vpow.pop %v614
        %v616 = vmul.f32 %v613, 1.442695
        %v617 = vpow.pop %v616
        %v618 = vadd.f32 %v615, 1.0
        %v619 = vadd.f32 %v617, 1.0
        %v620 = vrcp.pop %v618
        %v621 = vmul.f32 1.0, %v620
        %v622 = vrcp.pop %v619
        %v623 = vmul.f32 1.0, %v622
        %v624 = vmul.f32 %v610, %v621
        %v625 = vmul.f32 %v611, %v623
        %v626 = vld [vmem:[%s3] sm:$0xff]
        %v627 = vld [vmem:[%s3 + $0x8] sm:$0xff]
        %v628 = vld [vmem:[%s3 + $0x10] sm:$0xff]
        %v629 = vld [vmem:[%s3 + $0x18] sm:$0xff]
        %v630 = vld [vmem:[%s3 + $0x20] sm:$0xff]
        %v631 = vld [vmem:[%s3 + $0x28] sm:$0xff]
        %v632 = vld [vmem:[%s3 + $0x30] sm:$0xff]
        %v633 = vld [vmem:[%s3 + $0x38] sm:$0xff]
        %v634 = vld [vmem:[%s3 + $0x40] sm:$0xff]
        %v635 = vld [vmem:[%s3 + $0x48] sm:$0xff]
        %v636 = vld [vmem:[%s3 + $0x50] sm:$0xff]
        %v637 = vld [vmem:[%s3 + $0x58] sm:$0xff]
        %v638 = vld [vmem:[%s3 + $0x60] sm:$0xff]
        %v639 = vld [vmem:[%s3 + $0x68] sm:$0xff]
        %v640 = vld [vmem:[%s3 + $0x70] sm:$0xff]
        %v641 = vld [vmem:[%s3 + $0x78] sm:$0xff]
        %v642 = vld [vmem:[%s4] sm:$0x1]
        %v644 = vlaneseq
        %v645 = vshrl.u32 %v644, 7
        %v646 = vsub.s32 0, %v645
        %v647 = vrot.slane %v642, %v646
        %649 = vmatprep.subr.mxu0 0.0
        %650 = vmatpush1.msra.mxu0 %v626
        %651 = vmatprep.subr.mxu0 0.0
        %652 = vmatpush1.msra.mxu0 %v627
        %653 = vmatprep.subr.mxu0 0.0
        %654 = vmatpush1.msra.mxu0 %v628
        %655 = vmatprep.subr.mxu0 0.0
        %656 = vmatpush1.msra.mxu0 %v629
        %657 = vmatprep.subr.mxu0 0.0
        %658 = vmatpush1.msra.mxu0 %v630
        %659 = vmatprep.subr.mxu0 0.0
        %660 = vmatpush1.msra.mxu0 %v631
        %661 = vmatprep.subr.mxu0 0.0
        %662 = vmatpush1.msra.mxu0 %v632
        %663 = vmatprep.subr.mxu0 0.0
        %664 = vmatpush1.msra.mxu0 %v633
        %665 = vmatprep.subr.mxu0 0.0
        %666 = vmatpush1.msra.mxu0 %v634
        %667 = vmatprep.subr.mxu0 0.0
        %668 = vmatpush1.msra.mxu0 %v635
        %669 = vmatprep.subr.mxu0 0.0
        %670 = vmatpush1.msra.mxu0 %v636
        %671 = vmatprep.subr.mxu0 0.0
        %672 = vmatpush1.msra.mxu0 %v637
        %673 = vmatprep.subr.mxu0 0.0
        %674 = vmatpush1.msra.mxu0 %v638
        %675 = vmatprep.subr.mxu0 0.0
        %676 = vmatpush1.msra.mxu0 %v639
        %677 = vmatprep.subr.mxu0 0.0
        %678 = vmatpush1.msra.mxu0 %v640
        %679 = vmatprep.subr.mxu0 0.0
        %680 = vmatpush1.msra.mxu0 %v641
        %681 = vmatprep.subr.mxu0 0.0
        %682 = vmatpush1.msra.mxu0 0.0
        %683 = vmatprep.subr.mxu0 0.0
        %684 = vmatpush1.msra.mxu0 0.0
        %685 = vmatprep.subr.mxu0 0.0
        %686 = vmatpush1.msra.mxu0 0.0
        %687 = vmatprep.subr.mxu0 0.0
        %688 = vmatpush1.msra.mxu0 0.0
        %689 = vmatprep.subr.mxu0 0.0
        %690 = vmatpush1.msra.mxu0 0.0
        %691 = vmatprep.subr.mxu0 0.0
        %692 = vmatpush1.msra.mxu0 0.0
        %693 = vmatprep.subr.mxu0 0.0
        %694 = vmatpush1.msra.mxu0 0.0
        %695 = vmatprep.subr.mxu0 0.0
        %696 = vmatpush1.msra.mxu0 0.0
        %697 = vmatprep.subr.mxu0 0.0
        %698 = vmatpush1.msra.mxu0 0.0
        %699 = vmatprep.subr.mxu0 0.0
        %700 = vmatpush1.msra.mxu0 0.0
        %701 = vmatprep.subr.mxu0 0.0
        %702 = vmatpush1.msra.mxu0 0.0
        %703 = vmatprep.subr.mxu0 0.0
        %704 = vmatpush1.msra.mxu0 0.0
        %705 = vmatprep.subr.mxu0 0.0
        %706 = vmatpush1.msra.mxu0 0.0
        %707 = vmatprep.subr.mxu0 0.0
        %708 = vmatpush1.msra.mxu0 0.0
        %709 = vmatprep.subr.mxu0 0.0
        %710 = vmatpush1.msra.mxu0 0.0
        %711 = vmatprep.subr.mxu0 0.0
        %712 = vmatpush1.msra.mxu0 0.0
        %713 = vmatprep.mubr.f32.mxu0 0.0
        %714 = vmatmul.mubr.f32.gmra.mrb[0].mxu0 %v624
        %v715 = vpop.f32.mrb[0].mxu0
        %v716 = vadd.f32 %v647, %v715
        %v717 = vpop.f32.mrb[0].mxu0
        %718 = vmatprep.mubr.f32.mxu0 0.0
        %719 = vmatmul.mubr.f32.gmra.mrb[0].mxu0 %v625
        %v720 = vpop.f32.mrb[0].mxu0
        %v721 = vadd.f32 %v647, %v720
        %v722 = vpop.f32.mrb[0].mxu0
        %723 = vdwg.mxu0
        %v724 = vadd.f32 %v716, %v624
        %v725 = vadd.f32 %v721, %v625
        %v726 = vmax.f32 %v724, 0.0
        %v727 = vmax.f32 %v725, 0.0
        %v730 = vrot.slane %v726, 1
        %v731 = vrot.slane %v727, 1
        %v732 = vsel %vm336, %v730, %v731
        %v734 = vrot.slane %v726, 2
        %v735 = vrot.slane %v727, 2
        %v736 = vsel %vm342, %v734, %v735
        %v738 = vld [vmem:[%s5] sm:$0xff]
        %v739 = vld [vmem:[%s5 + $0x8] sm:$0xff]
        %v740 = vld [vmem:[%s5 + $0x10] sm:$0xff]
        %v741 = vld [vmem:[%s5 + $0x18] sm:$0xff]
        %v742 = vld [vmem:[%s5 + $0x20] sm:$0xff]
        %v743 = vld [vmem:[%s5 + $0x28] sm:$0xff]
        %v744 = vld [vmem:[%s5 + $0x30] sm:$0xff]
        %v745 = vld [vmem:[%s5 + $0x38] sm:$0xff]
        %v746 = vld [vmem:[%s5 + $0x40] sm:$0xff]
        %v747 = vld [vmem:[%s5 + $0x48] sm:$0xff]
        %v748 = vld [vmem:[%s5 + $0x50] sm:$0xff]
        %v749 = vld [vmem:[%s5 + $0x58] sm:$0xff]
        %v750 = vld [vmem:[%s5 + $0x60] sm:$0xff]
        %v751 = vld [vmem:[%s5 + $0x68] sm:$0xff]
        %v752 = vld [vmem:[%s5 + $0x70] sm:$0xff]
        %v753 = vld [vmem:[%s5 + $0x78] sm:$0xff]
        %v754 = vld [vmem:[%s5 + $0x80] sm:$0xff]
        %v755 = vld [vmem:[%s5 + $0x88] sm:$0xff]
        %v756 = vld [vmem:[%s5 + $0x90] sm:$0xff]
        %v757 = vld [vmem:[%s5 + $0x98] sm:$0xff]
        %v758 = vld [vmem:[%s5 + $0xa0] sm:$0xff]
        %v759 = vld [vmem:[%s5 + $0xa8] sm:$0xff]
        %v760 = vld [vmem:[%s5 + $0xb0] sm:$0xff]
        %v761 = vld [vmem:[%s5 + $0xb8] sm:$0xff]
        %v762 = vld [vmem:[%s5 + $0xc0] sm:$0xff]
        %v763 = vld [vmem:[%s5 + $0xc8] sm:$0xff]
        %v764 = vld [vmem:[%s5 + $0xd0] sm:$0xff]
        %v765 = vld [vmem:[%s5 + $0xd8] sm:$0xff]
        %v766 = vld [vmem:[%s5 + $0xe0] sm:$0xff]
        %v767 = vld [vmem:[%s5 + $0xe8] sm:$0xff]
        %v768 = vld [vmem:[%s5 + $0xf0] sm:$0xff]
        %v769 = vld [vmem:[%s5 + $0xf8] sm:$0xff]
        %v770 = vld [vmem:[%s5 + $0x100] sm:$0xff]
        %v771 = vld [vmem:[%s5 + $0x108] sm:$0xff]
        %v772 = vld [vmem:[%s5 + $0x110] sm:$0xff]
        %v773 = vld [vmem:[%s5 + $0x118] sm:$0xff]
        %v774 = vld [vmem:[%s5 + $0x120] sm:$0xff]
        %v775 = vld [vmem:[%s5 + $0x128] sm:$0xff]
        %v776 = vld [vmem:[%s5 + $0x130] sm:$0xff]
        %v777 = vld [vmem:[%s5 + $0x138] sm:$0xff]
        %v778 = vld [vmem:[%s5 + $0x140] sm:$0xff]
        %v779 = vld [vmem:[%s5 + $0x148] sm:$0xff]
        %v780 = vld [vmem:[%s5 + $0x150] sm:$0xff]
        %v781 = vld [vmem:[%s5 + $0x158] sm:$0xff]
        %v782 = vld [vmem:[%s5 + $0x160] sm:$0xff]
        %v783 = vld [vmem:[%s5 + $0x168] sm:$0xff]
        %v784 = vld [vmem:[%s5 + $0x170] sm:$0xff]
        %v785 = vld [vmem:[%s5 + $0x178] sm:$0xff]
        %v786 = vld [vmem:[%s5 + $0x180] sm:$0xff]
        %v787 = vld [vmem:[%s5 + $0x188] sm:$0xff]
        %v788 = vld [vmem:[%s5 + $0x190] sm:$0xff]
        %v789 = vld [vmem:[%s5 + $0x198] sm:$0xff]
        %v790 = vld [vmem:[%s5 + $0x1a0] sm:$0xff]
        %v791 = vld [vmem:[%s5 + $0x1a8] sm:$0xff]
        %v792 = vld [vmem:[%s5 + $0x1b0] sm:$0xff]
        %v793 = vld [vmem:[%s5 + $0x1b8] sm:$0xff]
        %v794 = vld [vmem:[%s5 + $0x1c0] sm:$0xff]
        %v795 = vld [vmem:[%s5 + $0x1c8] sm:$0xff]
        %v796 = vld [vmem:[%s5 + $0x1d0] sm:$0xff]
        %v797 = vld [vmem:[%s5 + $0x1d8] sm:$0xff]
        %v798 = vld [vmem:[%s5 + $0x1e0] sm:$0xff]
        %v799 = vld [vmem:[%s5 + $0x1e8] sm:$0xff]
        %v800 = vld [vmem:[%s5 + $0x1f0] sm:$0xff]
        %v801 = vld [vmem:[%s5 + $0x1f8] sm:$0xff]
        %v802 = vld [vmem:[%s5 + $0x200] sm:$0xff]
        %v803 = vld [vmem:[%s5 + $0x208] sm:$0xff]
        %v804 = vld [vmem:[%s5 + $0x210] sm:$0xff]
        %v805 = vld [vmem:[%s5 + $0x218] sm:$0xff]
        %v806 = vld [vmem:[%s5 + $0x220] sm:$0xff]
        %v807 = vld [vmem:[%s5 + $0x228] sm:$0xff]
        %v808 = vld [vmem:[%s5 + $0x230] sm:$0xff]
        %v809 = vld [vmem:[%s5 + $0x238] sm:$0xff]
        %v810 = vld [vmem:[%s5 + $0x240] sm:$0xff]
        %v811 = vld [vmem:[%s5 + $0x248] sm:$0xff]
        %v812 = vld [vmem:[%s5 + $0x250] sm:$0xff]
        %v813 = vld [vmem:[%s5 + $0x258] sm:$0xff]
        %v814 = vld [vmem:[%s5 + $0x260] sm:$0xff]
        %v815 = vld [vmem:[%s5 + $0x268] sm:$0xff]
        %v816 = vld [vmem:[%s5 + $0x270] sm:$0xff]
        %v817 = vld [vmem:[%s5 + $0x278] sm:$0xff]
        %v818 = vld [vmem:[%s5 + $0x280] sm:$0xff]
        %v819 = vld [vmem:[%s5 + $0x288] sm:$0xff]
        %v820 = vld [vmem:[%s5 + $0x290] sm:$0xff]
        %v821 = vld [vmem:[%s5 + $0x298] sm:$0xff]
        %v822 = vld [vmem:[%s5 + $0x2a0] sm:$0xff]
        %v823 = vld [vmem:[%s5 + $0x2a8] sm:$0xff]
        %v824 = vld [vmem:[%s5 + $0x2b0] sm:$0xff]
        %v825 = vld [vmem:[%s5 + $0x2b8] sm:$0xff]
        %v826 = vld [vmem:[%s5 + $0x2c0] sm:$0xff]
        %v827 = vld [vmem:[%s5 + $0x2c8] sm:$0xff]
        %v828 = vld [vmem:[%s5 + $0x2d0] sm:$0xff]
        %v829 = vld [vmem:[%s5 + $0x2d8] sm:$0xff]
        %v830 = vld [vmem:[%s5 + $0x2e0] sm:$0xff]
        %v831 = vld [vmem:[%s5 + $0x2e8] sm:$0xff]
        %v832 = vld [vmem:[%s5 + $0x2f0] sm:$0xff]
        %v833 = vld [vmem:[%s5 + $0x2f8] sm:$0xff]
        %v834 = vld [vmem:[%s6] sm:$0x3]
        %v836 = vlaneseq
        %v837 = vshrl.u32 %v836, 7
        %v838 = vsub.s32 0, %v837
        %v839 = vrot.slane %v834, %v838
        %v840 = vlaneseq
        %v841 = vshrl.u32 %v840, 7
        %v842 = vsub.s32 1, %v841
        %v843 = vrot.slane %v834, %v842
        %846 = vmatprep.subr.mxu0 %v739
        %847 = vmatpush1.msra.mxu0 %v738
        %848 = vmatprep.subr.mxu0 %v741
        %849 = vmatpush1.msra.mxu0 %v740
        %850 = vmatprep.subr.mxu0 %v743
        %851 = vmatpush1.msra.mxu0 %v742
        %852 = vmatprep.subr.mxu0 %v745
        %853 = vmatpush1.msra.mxu0 %v744
        %854 = vmatprep.subr.mxu0 %v747
        %855 = vmatpush1.msra.mxu0 %v746
        %856 = vmatprep.subr.mxu0 %v749
        %857 = vmatpush1.msra.mxu0 %v748
        %858 = vmatprep.subr.mxu0 %v751
        %859 = vmatpush1.msra.mxu0 %v750
        %860 = vmatprep.subr.mxu0 %v753
        %861 = vmatpush1.msra.mxu0 %v752
        %862 = vmatprep.subr.mxu0 %v755
        %863 = vmatpush1.msra.mxu0 %v754
        %864 = vmatprep.subr.mxu0 %v757
        %865 = vmatpush1.msra.mxu0 %v756
        %866 = vmatprep.subr.mxu0 %v759
        %867 = vmatpush1.msra.mxu0 %v758
        %868 = vmatprep.subr.mxu0 %v761
        %869 = vmatpush1.msra.mxu0 %v760
        %870 = vmatprep.subr.mxu0 %v763
        %871 = vmatpush1.msra.mxu0 %v762
        %872 = vmatprep.subr.mxu0 %v765
        %873 = vmatpush1.msra.mxu0 %v764
        %874 = vmatprep.subr.mxu0 %v767
        %875 = vmatpush1.msra.mxu0 %v766
        %876 = vmatprep.subr.mxu0 %v769
        %877 = vmatpush1.msra.mxu0 %v768
        %878 = vmatprep.subr.mxu0 %v771
        %879 = vmatpush1.msra.mxu0 %v770
        %880 = vmatprep.subr.mxu0 %v773
        %881 = vmatpush1.msra.mxu0 %v772
        %882 = vmatprep.subr.mxu0 %v775
        %883 = vmatpush1.msra.mxu0 %v774
        %884 = vmatprep.subr.mxu0 %v777
        %885 = vmatpush1.msra.mxu0 %v776
        %886 = vmatprep.subr.mxu0 %v779
        %887 = vmatpush1.msra.mxu0 %v778
        %888 = vmatprep.subr.mxu0 %v781
        %889 = vmatpush1.msra.mxu0 %v780
        %890 = vmatprep.subr.mxu0 %v783
        %891 = vmatpush1.msra.mxu0 %v782
        %892 = vmatprep.subr.mxu0 %v785
        %893 = vmatpush1.msra.mxu0 %v784
        %894 = vmatprep.subr.mxu0 %v787
        %895 = vmatpush1.msra.mxu0 %v786
        %896 = vmatprep.subr.mxu0 %v789
        %897 = vmatpush1.msra.mxu0 %v788
        %898 = vmatprep.subr.mxu0 %v791
        %899 = vmatpush1.msra.mxu0 %v790
        %900 = vmatprep.subr.mxu0 %v793
        %901 = vmatpush1.msra.mxu0 %v792
        %902 = vmatprep.subr.mxu0 %v795
        %903 = vmatpush1.msra.mxu0 %v794
        %904 = vmatprep.subr.mxu0 %v797
        %905 = vmatpush1.msra.mxu0 %v796
        %906 = vmatprep.subr.mxu0 %v799
        %907 = vmatpush1.msra.mxu0 %v798
        %908 = vmatprep.subr.mxu0 %v801
        %909 = vmatpush1.msra.mxu0 %v800
        %910 = vmatprep.mubr.f32.mxu0 %v732
        %911 = vmatmul.mubr.f32.gmra.mrb[0].mxu0 %v726
        %v912 = vpop.f32.mrb[0].mxu0
        %v913 = vadd.f32 %v839, %v912
        %v914 = vpop.f32.mrb[0].mxu0
        %v915 = vadd.f32 %v843, %v914
        %916 = vdwg.mxu0
        %917 = vmatprep.subr.mxu0 %v803
        %918 = vmatpush1.msra.mxu0 %v802
        %919 = vmatprep.subr.mxu0 %v805
        %920 = vmatpush1.msra.mxu0 %v804
        %921 = vmatprep.subr.mxu0 %v807
        %922 = vmatpush1.msra.mxu0 %v806
        %923 = vmatprep.subr.mxu0 %v809
        %924 = vmatpush1.msra.mxu0 %v808
        %925 = vmatprep.subr.mxu0 %v811
        %926 = vmatpush1.msra.mxu0 %v810
        %927 = vmatprep.subr.mxu0 %v813
        %928 = vmatpush1.msra.mxu0 %v812
        %929 = vmatprep.subr.mxu0 %v815
        %930 = vmatpush1.msra.mxu0 %v814
        %931 = vmatprep.subr.mxu0 %v817
        %932 = vmatpush1.msra.mxu0 %v816
        %933 = vmatprep.subr.mxu0 %v819
        %934 = vmatpush1.msra.mxu0 %v818
        %935 = vmatprep.subr.mxu0 %v821
        %936 = vmatpush1.msra.mxu0 %v820
        %937 = vmatprep.subr.mxu0 %v823
        %938 = vmatpush1.msra.mxu0 %v822
        %939 = vmatprep.subr.mxu0 %v825
        %940 = vmatpush1.msra.mxu0 %v824
        %941 = vmatprep.subr.mxu0 %v827
        %942 = vmatpush1.msra.mxu0 %v826
        %943 = vmatprep.subr.mxu0 %v829
        %944 = vmatpush1.msra.mxu0 %v828
        %945 = vmatprep.subr.mxu0 %v831
        %946 = vmatpush1.msra.mxu0 %v830
        %947 = vmatprep.subr.mxu0 %v833
        %948 = vmatpush1.msra.mxu0 %v832
        %949 = vmatprep.subr.mxu0 0.0
        %950 = vmatpush1.msra.mxu0 0.0
        %951 = vmatprep.subr.mxu0 0.0
        %952 = vmatpush1.msra.mxu0 0.0
        %953 = vmatprep.subr.mxu0 0.0
        %954 = vmatpush1.msra.mxu0 0.0
        %955 = vmatprep.subr.mxu0 0.0
        %956 = vmatpush1.msra.mxu0 0.0
        %957 = vmatprep.subr.mxu0 0.0
        %958 = vmatpush1.msra.mxu0 0.0
        %959 = vmatprep.subr.mxu0 0.0
        %960 = vmatpush1.msra.mxu0 0.0
        %961 = vmatprep.subr.mxu0 0.0
        %962 = vmatpush1.msra.mxu0 0.0
        %963 = vmatprep.subr.mxu0 0.0
        %964 = vmatpush1.msra.mxu0 0.0
        %965 = vmatprep.subr.mxu0 0.0
        %966 = vmatpush1.msra.mxu0 0.0
        %967 = vmatprep.subr.mxu0 0.0
        %968 = vmatpush1.msra.mxu0 0.0
        %969 = vmatprep.subr.mxu0 0.0
        %970 = vmatpush1.msra.mxu0 0.0
        %971 = vmatprep.subr.mxu0 0.0
        %972 = vmatpush1.msra.mxu0 0.0
        %973 = vmatprep.subr.mxu0 0.0
        %974 = vmatpush1.msra.mxu0 0.0
        %975 = vmatprep.subr.mxu0 0.0
        %976 = vmatpush1.msra.mxu0 0.0
        %977 = vmatprep.subr.mxu0 0.0
        %978 = vmatpush1.msra.mxu0 0.0
        %979 = vmatprep.subr.mxu0 0.0
        %980 = vmatpush1.msra.mxu0 0.0
        %981 = vmatprep.mubr.f32.mxu0 0.0
        %982 = vmatmul.mubr.f32.gmra.mrb[0].mxu0 %v736
        %v983 = vpop.f32.mrb[0].mxu0
        %v984 = vadd.f32 %v913, %v983
        %v985 = vpop.f32.mrb[0].mxu0
        %v986 = vadd.f32 %v915, %v985
        %987 = vdwg.mxu0
        %v988 = vadd.f32 %v984, %v736
        %v989 = vxor.u32 %v986, 2147483648
        %v990 = vmul.f32 %v989, 1.442695
        %v991 = vpow.pop %v990
        %v992 = vadd.f32 %v991, 1.0
        %v993 = vrcp.pop %v992
        %v994 = vmul.f32 1.0, %v993
        %v995 = vmul.f32 %v988, %v994
        %v996 = vmul.f32 %v995, %v995
        %v997 = vrot.slane %v995, 4
        %v998 = vadd.f32 %v995, %v997
        %v999 = vrot.slane %v998, 2
        %v1000 = vadd.f32 %v998, %v999
        %v1001 = vrot.slane %v1000, 1
        %v1002 = vadd.f32 %v1000, %v1001
        %v1003 = vrot.slane %v996, 4
        %v1004 = vadd.f32 %v996, %v1003
        %v1005 = vrot.slane %v1004, 2
        %v1006 = vadd.f32 %v1004, %v1005
        %v1007 = vrot.slane %v1006, 1
        %v1008 = vadd.f32 %v1006, %v1007
        %vm1009 = vcmask 1040384
        %v1010 = vsel %vm1009, %v1002, %v1008
        %v1011 = vld [vmem:[#allocation4] sm:$0xff]
        %v1012 = vld [vmem:[#allocation4 + $0x8] sm:$0xff]
        %v1013 = vld [vmem:[#allocation4 + $0x10] sm:$0xff]
        %v1014 = vld [vmem:[#allocation4 + $0x18] sm:$0xff]
        %v1015 = vld [vmem:[#allocation4 + $0x20] sm:$0xff]
        %v1016 = vld [vmem:[#allocation4 + $0x28] sm:$0xff]
        %v1017 = vld [vmem:[#allocation4 + $0x30] sm:$0xff]
        %v1018 = vld [vmem:[#allocation4 + $0x38] sm:$0xff]
        %v1019 = vld [vmem:[#allocation4 + $0x40] sm:$0xff]
        %v1020 = vld [vmem:[#allocation4 + $0x48] sm:$0xff]
        %v1021 = vld [vmem:[#allocation4 + $0x50] sm:$0xff]
        %v1022 = vld [vmem:[#allocation4 + $0x58] sm:$0xff]
        %v1023 = vld [vmem:[#allocation4 + $0x60] sm:$0xff]
        %v1024 = vld [vmem:[#allocation4 + $0x68] sm:$0xff]
        %v1025 = vld [vmem:[#allocation4 + $0x70] sm:$0xff]
        %v1026 = vld [vmem:[#allocation4 + $0x78] sm:$0xff]
        %1027 = vmatprep.subr.mxu0 0.0
        %1028 = vmatpush1.msra.mxu0 %v1011
        %1029 = vmatprep.subr.mxu0 0.0
        %1030 = vmatpush1.msra.mxu0 %v1012
        %1031 = vmatprep.subr.mxu0 0.0
        %1032 = vmatpush1.msra.mxu0 %v1013
        %1033 = vmatprep.subr.mxu0 0.0
        %1034 = vmatpush1.msra.mxu0 %v1014
        %1035 = vmatprep.subr.mxu0 0.0
        %1036 = vmatpush1.msra.mxu0 %v1015
        %1037 = vmatprep.subr.mxu0 0.0
        %1038 = vmatpush1.msra.mxu0 %v1016
        %1039 = vmatprep.subr.mxu0 0.0
        %1040 = vmatpush1.msra.mxu0 %v1017
        %1041 = vmatprep.subr.mxu0 0.0
        %1042 = vmatpush1.msra.mxu0 %v1018
        %1043 = vmatprep.subr.mxu0 0.0
        %1044 = vmatpush1.msra.mxu0 %v1019
        %1045 = vmatprep.subr.mxu0 0.0
        %1046 = vmatpush1.msra.mxu0 %v1020
        %1047 = vmatprep.subr.mxu0 0.0
        %1048 = vmatpush1.msra.mxu0 %v1021
        %1049 = vmatprep.subr.mxu0 0.0
        %1050 = vmatpush1.msra.mxu0 %v1022
        %1051 = vmatprep.subr.mxu0 0.0
        %1052 = vmatpush1.msra.mxu0 %v1023
        %1053 = vmatprep.subr.mxu0 0.0
        %1054 = vmatpush1.msra.mxu0 %v1024
        %1055 = vmatprep.subr.mxu0 0.0
        %1056 = vmatpush1.msra.mxu0 %v1025
        %1057 = vmatprep.subr.mxu0 0.0
        %1058 = vmatpush1.msra.mxu0 %v1026
        %1059 = vmatprep.subr.mxu0 0.0
        %1060 = vmatpush1.msra.mxu0 0.0
        %1061 = vmatprep.subr.mxu0 0.0
        %1062 = vmatpush1.msra.mxu0 0.0
        %1063 = vmatprep.subr.mxu0 0.0
        %1064 = vmatpush1.msra.mxu0 0.0
        %1065 = vmatprep.subr.mxu0 0.0
        %1066 = vmatpush1.msra.mxu0 0.0
        %1067 = vmatprep.subr.mxu0 0.0
        %1068 = vmatpush1.msra.mxu0 0.0
        %1069 = vmatprep.subr.mxu0 0.0
        %1070 = vmatpush1.msra.mxu0 0.0
        %1071 = vmatprep.subr.mxu0 0.0
        %1072 = vmatpush1.msra.mxu0 0.0
        %1073 = vmatprep.subr.mxu0 0.0
        %1074 = vmatpush1.msra.mxu0 0.0
        %1075 = vmatprep.subr.mxu0 0.0
        %1076 = vmatpush1.msra.mxu0 0.0
        %1077 = vmatprep.subr.mxu0 0.0
        %1078 = vmatpush1.msra.mxu0 0.0
        %1079 = vmatprep.subr.mxu0 0.0
        %1080 = vmatpush1.msra.mxu0 0.0
        %1081 = vmatprep.subr.mxu0 0.0
        %1082 = vmatpush1.msra.mxu0 0.0
        %1083 = vmatprep.subr.mxu0 0.0
        %1084 = vmatpush1.msra.mxu0 0.0
        %1085 = vmatprep.subr.mxu0 0.0
        %1086 = vmatpush1.msra.mxu0 0.0
        %1087 = vmatprep.subr.mxu0 0.0
        %1088 = vmatpush1.msra.mxu0 0.0
        %1089 = vmatprep.subr.mxu0 0.0
        %1090 = vmatpush1.msra.mxu0 0.0
        %1091 = vmatprep.mubr.f32.mxu0 0.0
        %1092 = vmatmul.mubr.f32.gmra.mrb[0].mxu0 %v1010
        %v1093 = vpop.f32.mrb[0].mxu0
        %v1094 = vadd.f32 0.0, %v1093
        %v1095 = vpop.f32.mrb[0].mxu0
        %1096 = vdwg.mxu0
        %v1097 = vmul.f32 %v1094, 0.125
        %v1098 = vmul.f32 %v1097, %v1097
        %v1100 = vrot.slane %v1098, 7
        %v1102 = vsub.f32 %v1097, %v1100
        %v1103 = vmax.f32 %v1102, 0.0
        %v1104 = vrsqrt.pop %v1103
        %v1105 = vmul.f32 %v1103, %v1104
        %vm1106 = vcmp.eq.f32.partialorder %v1103, inf
        %v1107 = vsel %vm1106, %v1103, %v1105
        %vm1108 = vcmp.eq.f32.partialorder %v1103, 0.0
        %v1109 = vand.u32 %v1103, 2147483648
        %v1110 = vsel %vm1108, %v1109, %v1107
        %v1111 = vadd.f32 %v1110, 1e-06
        %v1112 = vrcp.pop %v1111
        %v1113 = vmul.f32 1.0, %v1112
        %v1114 = vlaneseq
        %v1115 = vshrl.u32 %v1114, 7
        %v1116 = vsub.s32 0, %v1115
        %v1117 = vrot.slane %v1097, %v1116
        %v1118 = vsub.f32 %v995, %v1117
        %v1119 = vlaneseq
        %v1120 = vshrl.u32 %v1119, 7
        %v1121 = vsub.s32 1, %v1120
        %v1122 = vrot.slane %v1113, %v1121
        %v1123 = vmul.f32 %v1118, %v1122
        %1124 = vst [vmem:[%s331] sm:$0xff] %v1123
        %p1125 = scmp.lt.s32.totalorder %s21, 1
        %s1126 = scalar_select %p1125, %s21, 1
        %s1127 = smul.addr %s1126, 8
        %s1128 = scalar_lea.vmem %s8, %s1127
        // Predicated region
        $region61: #{stconv_forward.1} parent=51 // pred_check
          %p1129 = pneg %p212
        $region62: #{stconv_forward.1} parent=51 // pred_check_branch
          %1131 = sbr.rel (%p1129) target = $region64
        $region63: #{stconv_forward.1} parent=51 // pred_region
          _
        $region64: #{stconv_forward.1} parent=51 // pred_fallthru
          _
      $region52: #{stconv_forward.1} parent=5 // pred_fallthru
        _
      %p1132 = scmp.le.s32.totalorder 2, %s16
      // Predicated region
      $region65: #{stconv_forward.1} parent=5 // pred_check
        %p1133 = pneg %p1132
      $region66: #{stconv_forward.1} parent=5 // pred_check_branch
        %1135 = sbr.rel (%p1133) target = $region68
      $region67: #{stconv_forward.1} parent=5 // pred_region
        %s1136 = ssub.s32 %s16, 2
        // Predicated region
        $region69: #{stconv_forward.1} parent=67 // pred_check
          %p1137 = pneg %p218
        $region70: #{stconv_forward.1} parent=67 // pred_check_branch
          %1139 = sbr.rel (%p1137) target = $region72
        $region71: #{stconv_forward.1} parent=67 // pred_region
          %p1140 = scmp.lt.s32.totalorder %s22, 1
          %s1141 = scalar_select %p1140, %s22, 1
          %s1142 = smul.addr %s1141, 8
          %s1143 = scalar_lea.vmem %s8, %s1142
        $region72: #{stconv_forward.1} parent=67 // pred_fallthru
          _
      $region68: #{stconv_forward.1} parent=5 // pred_fallthru
        _
    $region6: #{stconv_forward.1} parent=1 // loop_footer
      %s20 = sadd.s32 1, %s16
    $region7: #{stconv_forward.1} parent=1 // loop_footer_branch
      %15 = sbr.rel target = $region3
    $region8: #{stconv_forward.1} parent=1 // loop_exit
      _
    %1144 = vsyncpa [#allocation3], 1
    %s1145 = scalar_lea.sflag [#allocation3], 1
    %1146 = vsyncpa %s1145, 1
    %1147 = vsyncpa [#allocation5], 1

</llo_original>
